<compile_context>
chip_gen: v7x
topology: tpu7x:2x2x1
jax: 0.10.0
libtpu: 0.0.40
codegen_flags: <defaults>
</compile_context>

<pallas_src>
import jax
import jax.numpy as jnp
import numpy as np
from jax.experimental import pallas as pl
from jax.experimental.pallas import tpu as pltpu

# ---------------- model dimensions (small but TPU-tile friendly) ----------------
B = 2             # batch
FRAME = 128       # synthetic "wav2vec2" frame width (lane dim)
T = 8             # frames per utterance
L = T * FRAME     # raw waveform samples per utterance
C = 256           # fin_channel
P = 2             # pool_head (emotion AttentionalPool layers)
H = 4             # attention heads inside AttentionalPool
N_ID = 128        # id classes (1251 in the original, reduced for the example)
N_EMO = 4         # emotion classes
EMO_PAD = 128     # emotion logits padded to a full lane width
SCORE_PAD = 128   # padded fused score width (id: lanes [0,H); emo: lanes [H, H+P*H))
MAX_M_ROWS = 256  # target MXU M rows per grid step (fills v6e/v7x; >=128 fills v5e)


def _choose_bb(b, t):
    """Per-step batch block: fill the MXU M axis (bb*t -> MAX_M_ROWS), keep >=2 grid
    steps for the second TensorCore (v7x) when that still feeds the MXU >=64 rows,
    and keep non-final output blocks (8,128)-tileable.  bb always divides b."""
    divisors = [d for d in range(1, b + 1) if b % d == 0]
    # a block either covers the whole batch (grid==1) or must be sublane-aligned
    cands = [d for d in divisors if d == b or d % 8 == 0]
    target = max(1, MAX_M_ROWS // t)
    fill = [d for d in cands if d <= target] or [min(cands)]
    bb = max(fill)
    multi = [d for d in fill if b // d >= 2 and d * t >= 64]
    if multi:
        bb = max(multi)          # keep >=2 parallel grid steps (v7x megacore)
    return bb


def emotion_kernel(frames_ref, w2v_w_ref, fc1_wT_ref, proj_ref, expand_ref,
                   cls_ref, bias_ref, out_ref):
    f32 = jnp.float32
    m = frames_ref.shape[0]          # bb * t rows folded into the matmul M axis
    bb = out_ref.shape[0]
    t = m // bb
    c = w2v_w_ref.shape[1]

    w2v_b = bias_ref[0:1, :c]        # [1, C]
    fc1_b = bias_ref[1:2, :c]        # [1, C]
    filt0 = bias_ref[2:3, :c]        # [1, C]  id_filter[0]
    emo_b = bias_ref[3:4, :EMO_PAD]  # [1, 128]

    # ---- shared wav2vec2 stub: frames @ W + b (bf16 MXU operands, f32 accumulation) ----
    h = jnp.dot(frames_ref[...].astype(jnp.bfloat16), w2v_w_ref[...],
                preferred_element_type=f32) + w2v_b                          # [M, C]
    # ---- emotion trunk: relu -> fc1 ----
    x = jnp.dot(jnp.maximum(h, 0.0).astype(jnp.bfloat16), fc1_wT_ref[...],
                preferred_element_type=f32) + fc1_b                          # [M, C]

    # ---- fused id/emo attention pooling (one score tile, one softmax, one expansion) ----
    hx = jnp.concatenate([h, x], axis=1)                                     # [M, 2C] f32
    scores = jnp.dot(hx.astype(jnp.bfloat16), proj_ref[...],
                     preferred_element_type=f32)                             # [M, 128]

    # per-(batch-segment, lane) softmax over the t frames via layout-free reshape
    s3 = scores.reshape(bb, t, SCORE_PAD)
    e = jnp.exp(s3 - jnp.max(s3, axis=1, keepdims=True))
    w = e * pl.reciprocal(jnp.sum(e, axis=1, keepdims=True), approx=True)    # [bb, t, 128]

    # head->channel expansion; id_filter[1:] is folded into the emotion half of `expand`
    w_exp = jnp.dot(w.reshape(m, SCORE_PAD).astype(jnp.bfloat16),
                    expand_ref[...], preferred_element_type=f32)             # [M, 2C]
    pooled = jnp.sum((hx * w_exp).reshape(bb, t, 2 * c), axis=1)             # [bb, 2C]
    id_feat = pooled[:, :c]                                                  # [bb, C]
    emo_pool = pooled[:, c:]                                                 # [bb, C]

    # ---- frozen cosine id classifier (ID_Network.get_close_id) ----
    inv_norm = jax.lax.rsqrt(jnp.maximum(
        jnp.sum(id_feat * id_feat, axis=1, keepdims=True), 1e-24))
    id_logits = jnp.clip(
        jnp.dot((id_feat * inv_norm).astype(jnp.bfloat16), cls_ref[:, :N_ID],
                preferred_element_type=f32), -1.0, 1.0)                      # [bb, N_ID]

    # ---- emotion head ----
    feat = id_feat * filt0 + emo_pool                                        # [bb, C]
    emo = jnp.dot(feat.astype(jnp.bfloat16), cls_ref[:, N_ID:],
                  preferred_element_type=f32) + emo_b                        # [bb, 128]

    # single lane-dense output slab: [id logits | emo logits]
    out_ref[...] = jnp.concatenate([id_logits, emo], axis=1)


def prepare_params(params):
    """Batch-invariant precompute hoisted out of the kernel (runs once, host side)."""
    d = C // H
    head_mask = np.asarray(np.arange(C)[:, None] // d == np.arange(H)[None, :],
                           np.float32)                                        # [C, H]

    # fused block-diagonal score projection: [h | x] @ proj -> 128 score lanes
    proj = np.zeros((2 * C, SCORE_PAD), np.float32)
    proj[:C, :H] = np.asarray(params["a_id"][0])[:, None] * head_mask
    for p in range(P):
        proj[C:, H + p * H: H + (p + 1) * H] = (
            np.asarray(params["a_pools"][p])[:, None] * head_mask)

    # fused head->channel expansion; emotion half has id_filter[1:] folded in
    expand = np.zeros((SCORE_PAD, 2 * C), np.float32)
    expand[:H, :C] = head_mask.T
    for p in range(P):
        expand[H + p * H: H + (p + 1) * H, C:] = (
            np.asarray(params["id_filter"][p + 1])[None, :] * head_mask.T)

    # merged classifier: pre-normalized cosine id weights | padded emotion weights
    w = np.asarray(params["idcls_w"])
    w_n = w / np.maximum(np.linalg.norm(w, axis=1, keepdims=True), 1e-12)
    cls = np.zeros((C, N_ID + EMO_PAD), np.float32)
    cls[:, :N_ID] = w_n.T
    cls[:, N_ID:] = np.asarray(params["emo_w"]).T

    # one (8, 2C) bias slab: rows = w2v_b, fc1_b, id_filter[0], emo_b
    biases = np.zeros((8, 2 * C), np.float32)
    biases[0, :C] = np.asarray(params["w2v_b"][0])
    biases[1, :C] = np.asarray(params["fc1_b"][0])
    biases[2, :C] = np.asarray(params["id_filter"][0])
    biases[3, :EMO_PAD] = np.asarray(params["emo_b"][0])

    return {
        "w2v_w": jnp.asarray(params["w2v_w"], jnp.bfloat16),        # [FRAME, C]
        "fc1_wT": jnp.asarray(params["fc1_w"]).T.astype(jnp.bfloat16),  # [C, C]
        "proj": jnp.asarray(proj, jnp.bfloat16),                    # [2C, 128]
        "expand": jnp.asarray(expand, jnp.bfloat16),                # [128, 2C]
        "cls": jnp.asarray(cls, jnp.bfloat16),                      # [C, 256]
        "biases": jnp.asarray(biases, jnp.float32),                 # [8, 2C]
    }


@jax.jit
def emotion_network_forward(x_wave, prep):
    """x_wave: [B, L] raw waveform.  Returns (emo_out [B, 4], id_out [B, N_ID])."""
    b, l = x_wave.shape
    assert l % FRAME == 0
    t = l // FRAME
    bb = _choose_bb(b, t)                         # batch block folded into matmul M axis
    m = bb * t
    frames = x_wave.reshape(b * t, FRAME)         # glue: framing stub for the w2v front-end

    def full(shape):
        return pl.BlockSpec(shape, lambda i: (0, 0))

    grid_spec = pltpu.PrefetchScalarGridSpec(
        num_scalar_prefetch=0,
        grid=(b // bb,),
        in_specs=[
            pl.BlockSpec((m, FRAME), lambda i: (i, 0)),    # frames (per batch block)
            full((FRAME, C)),                              # w2v_w            (bf16)
            full((C, C)),                                  # fc1_wT           (bf16)
            full((2 * C, SCORE_PAD)),                      # fused score proj (bf16)
            full((SCORE_PAD, 2 * C)),                      # fused expansion  (bf16)
            full((C, N_ID + EMO_PAD)),                     # id|emo classifier (bf16)
            full((8, 2 * C)),                              # bias slab        (f32)
        ],
        out_specs=pl.BlockSpec((bb, N_ID + EMO_PAD), lambda i: (i, 0)),
    )
    out = pl.pallas_call(
        emotion_kernel,
        out_shape=jax.ShapeDtypeStruct((b, N_ID + EMO_PAD), jnp.float32),
        grid_spec=grid_spec,
        compiler_params=pltpu.CompilerParams(dimension_semantics=("parallel",)),
    )(frames, prep["w2v_w"], prep["fc1_wT"], prep["proj"], prep["expand"],
      prep["cls"], prep["biases"])

    return out[:, N_ID:N_ID + N_EMO], out[:, :N_ID]


# ---------------- pure-JAX reference (f32, same math, no Pallas) ----------------
def _ref_attention_pool(x, a, head_mask):
    s = jnp.einsum("btc,ch->bth", x * a[None], head_mask)
    s = s - jnp.max(s, axis=1, keepdims=True)
    e = jnp.exp(s)
    w = e / jnp.sum(e, axis=1, keepdims=True)
    w_full = jnp.einsum("bth,ch->btc", w, head_mask)
    return jnp.sum(w_full * x, axis=1)                                   # [B, C]


def reference_forward(x_wave, params):
    b, l = x_wave.shape
    frames = x_wave.reshape(b, l // FRAME, FRAME)
    d = C // H
    head_mask = (np.arange(C)[:, None] // d == np.arange(H)[None, :]).astype(np.float32)
    head_mask = jnp.asarray(head_mask)

    h = jnp.einsum("btf,fc->btc", frames, params["w2v_w"]) + params["w2v_b"][None]
    id_feat = _ref_attention_pool(h, params["a_id"][0], head_mask)       # [B, C]
    id_feat_n = id_feat / jnp.maximum(
        jnp.linalg.norm(id_feat, axis=1, keepdims=True), 1e-12)
    w_id_n = params["idcls_w"] / jnp.maximum(
        jnp.linalg.norm(params["idcls_w"], axis=1, keepdims=True), 1e-12)
    id_out = jnp.clip(id_feat_n @ w_id_n.T, -1.0, 1.0)

    x = jnp.maximum(h, 0.0)
    x = jnp.einsum("btc,oc->bto", x, params["fc1_w"]) + params["fc1_b"][None]
    feat = id_feat * params["id_filter"][0][None]
    for p in range(P):
        pooled = _ref_attention_pool(x, params["a_pools"][p], head_mask)
        feat = feat + pooled * params["id_filter"][p + 1][None]
    emo = feat @ params["emo_w"].T + params["emo_b"]
    return emo[:, :N_EMO], id_out


def init_params(key):
    ks = jax.random.split(key, 10)
    emo_w = jnp.zeros((EMO_PAD, C), jnp.float32)
    emo_w = emo_w.at[:N_EMO].set(0.05 * jax.random.normal(ks[7], (N_EMO, C), jnp.float32))
    emo_b = jnp.zeros((1, EMO_PAD), jnp.float32)
    emo_b = emo_b.at[0, :N_EMO].set(0.01 * jax.random.normal(ks[8], (N_EMO,), jnp.float32))
    return {
        "w2v_w": 0.05 * jax.random.normal(ks[0], (FRAME, C), jnp.float32),
        "w2v_b": 0.01 * jax.random.normal(ks[1], (1, C), jnp.float32),
        "a_id": jax.random.normal(ks[2], (1, C), jnp.float32),
        "idcls_w": jax.random.normal(ks[3], (N_ID, C), jnp.float32),
        "fc1_w": 0.05 * jax.random.normal(ks[4], (C, C), jnp.float32),
        "fc1_b": 0.01 * jax.random.normal(ks[5], (1, C), jnp.float32),
        "a_pools": jax.random.normal(ks[6], (P, C), jnp.float32),
        "id_filter": jax.random.normal(ks[9], (P + 1, C), jnp.float32),
        "emo_w": emo_w,
        "emo_b": emo_b,
    }


if __name__ == "__main__":
    key = jax.random.PRNGKey(0)
    k_x, k_p = jax.random.split(key)
    x = jax.random.normal(k_x, (B, L), jnp.float32)                      # raw waveform [B, L]
    params = init_params(k_p)
    prep = prepare_params(params)                                        # hoisted precompute

    emo_out, id_out = emotion_network_forward(x, prep)
    emo_out = jax.block_until_ready(emo_out)
    id_out = jax.block_until_ready(id_out)

    assert emo_out.shape == (B, N_EMO) and id_out.shape == (B, N_ID)

    # bf16 MXU operands + pl.reciprocal(approx=True) softmax denominators -> ~1e-2 deviation
    # from the pure-f32 reference; tolerance chosen accordingly.
    emo_ref, id_ref = reference_forward(x, params)
    np.testing.assert_allclose(np.asarray(emo_out), np.asarray(emo_ref), rtol=2.5e-2, atol=2.5e-2)
    np.testing.assert_allclose(np.asarray(id_out), np.asarray(id_ref), rtol=2.5e-2, atol=2.5e-2)

    print("KERNEL_OK")
</pallas_src>

<mosaic_0001>
module attributes {stable_mosaic.version = 11 : i64} {
  func.func @emotion_kernel(%arg0: i32, %arg1: memref<16x128xf32, #tpu.memory_space<vmem>>, %arg2: memref<128x256xbf16, #tpu.memory_space<vmem>>, %arg3: memref<256x256xbf16, #tpu.memory_space<vmem>>, %arg4: memref<512x128xbf16, #tpu.memory_space<vmem>>, %arg5: memref<128x512xbf16, #tpu.memory_space<vmem>>, %arg6: memref<256x256xbf16, #tpu.memory_space<vmem>>, %arg7: memref<8x512xf32, #tpu.memory_space<vmem>>, %arg8: memref<2x256xf32, #tpu.memory_space<vmem>>) attributes {dimension_semantics = [#tpu.dimension_semantics<parallel>], iteration_bounds = array<i64: 1>, scalar_prefetch = 0 : i64, scratch_operands = 0 : i64, tpu.core_type = #tpu.core_type<tc>, window_params = [{transform_indices = @transform_0, window_bounds = array<i64: 16, 128>}, {pipeline_mode = #tpu.pipeline_mode<synchronous>, transform_indices = @transform_1, window_bounds = array<i64: 128, 256>}, {pipeline_mode = #tpu.pipeline_mode<synchronous>, transform_indices = @transform_2, window_bounds = array<i64: 256, 256>}, {pipeline_mode = #tpu.pipeline_mode<synchronous>, transform_indices = @transform_3, window_bounds = array<i64: 512, 128>}, {pipeline_mode = #tpu.pipeline_mode<synchronous>, transform_indices = @transform_4, window_bounds = array<i64: 128, 512>}, {pipeline_mode = #tpu.pipeline_mode<synchronous>, transform_indices = @transform_5, window_bounds = array<i64: 256, 256>}, {pipeline_mode = #tpu.pipeline_mode<synchronous>, transform_indices = @transform_6, window_bounds = array<i64: 8, 512>}, {transform_indices = @transform_7, window_bounds = array<i64: 2, 256>}]} {
    %c0 = arith.constant 0 : index
    %c0_0 = arith.constant 0 : index
    %0 = vector.load %arg7[%c0, %c0_0] : memref<8x512xf32, #tpu.memory_space<vmem>>, vector<1x256xf32>
    %c1 = arith.constant 1 : index
    %c0_1 = arith.constant 0 : index
    %1 = vector.load %arg7[%c1, %c0_1] : memref<8x512xf32, #tpu.memory_space<vmem>>, vector<1x256xf32>
    %c2 = arith.constant 2 : index
    %c0_2 = arith.constant 0 : index
    %2 = vector.load %arg7[%c2, %c0_2] : memref<8x512xf32, #tpu.memory_space<vmem>>, vector<1x256xf32>
    %c3 = arith.constant 3 : index
    %c0_3 = arith.constant 0 : index
    %3 = vector.load %arg7[%c3, %c0_3] : memref<8x512xf32, #tpu.memory_space<vmem>>, vector<1x128xf32>
    %c0_4 = arith.constant 0 : index
    %c0_5 = arith.constant 0 : index
    %4 = vector.load %arg1[%c0_4, %c0_5] : memref<16x128xf32, #tpu.memory_space<vmem>>, vector<16x128xf32>
    %5 = arith.truncf %4 : vector<16x128xf32> to vector<16x128xbf16>
    %c0_6 = arith.constant 0 : index
    %c0_7 = arith.constant 0 : index
    %6 = vector.load %arg2[%c0_6, %c0_7] : memref<128x256xbf16, #tpu.memory_space<vmem>>, vector<128x256xbf16>
    %cst = arith.constant dense<0.000000e+00> : vector<16x256xf32>
    %7 = tpu.matmul %5, %6, %cst {dimension_numbers = #tpu.dot_dimension_numbers<[1], [0], [0], [1], [0, 0, 1, 1], [], []>} : vector<16x128xbf16>, vector<128x256xbf16>, vector<16x256xf32> -> vector<16x256xf32>
    %8 = vector.broadcast %0 : vector<1x256xf32> to vector<16x256xf32>
    %9 = arith.addf %7, %8 : vector<16x256xf32>
    %cst_8 = arith.constant 0.000000e+00 : f32
    %10 = vector.broadcast %cst_8 : f32 to vector<16x256xf32>
    %11 = arith.maximumf %9, %10 : vector<16x256xf32>
    %12 = arith.truncf %11 : vector<16x256xf32> to vector<16x256xbf16>
    %c0_9 = arith.constant 0 : index
    %c0_10 = arith.constant 0 : index
    %13 = vector.load %arg3[%c0_9, %c0_10] : memref<256x256xbf16, #tpu.memory_space<vmem>>, vector<256x256xbf16>
    %cst_11 = arith.constant dense<0.000000e+00> : vector<16x256xf32>
    %14 = tpu.matmul %12, %13, %cst_11 {dimension_numbers = #tpu.dot_dimension_numbers<[1], [0], [0], [1], [0, 0, 1, 1], [], []>} : vector<16x256xbf16>, vector<256x256xbf16>, vector<16x256xf32> -> vector<16x256xf32>
    %15 = vector.broadcast %1 : vector<1x256xf32> to vector<16x256xf32>
    %16 = arith.addf %14, %15 : vector<16x256xf32>
    %17 = tpu.concatenate %9, %16 in 1 : vector<16x256xf32>, vector<16x256xf32> -> vector<16x512xf32>
    %18 = arith.truncf %17 : vector<16x512xf32> to vector<16x512xbf16>
    %c0_12 = arith.constant 0 : index
    %c0_13 = arith.constant 0 : index
    %19 = vector.load %arg4[%c0_12, %c0_13] : memref<512x128xbf16, #tpu.memory_space<vmem>>, vector<512x128xbf16>
    %cst_14 = arith.constant dense<0.000000e+00> : vector<16x128xf32>
    %20 = tpu.matmul %18, %19, %cst_14 {dimension_numbers = #tpu.dot_dimension_numbers<[1], [0], [0], [1], [0, 0, 1, 1], [], []>} : vector<16x512xbf16>, vector<512x128xbf16>, vector<16x128xf32> -> vector<16x128xf32>
    %21 = vector.shape_cast %20 : vector<16x128xf32> to vector<2x8x128xf32>
    %cst_15 = arith.constant dense<0xFF800000> : vector<2x128xf32>
    %22 = vector.multi_reduction <maximumf>, %21, %cst_15 [1] : vector<2x8x128xf32> to vector<2x128xf32>
    %23 = vector.shape_cast %22 : vector<2x128xf32> to vector<2x1x128xf32>
    %24 = vector.broadcast %23 : vector<2x1x128xf32> to vector<2x8x128xf32>
    %25 = arith.subf %21, %24 : vector<2x8x128xf32>
    %26 = math.exp %25 : vector<2x8x128xf32>
    %cst_16 = arith.constant dense<0.000000e+00> : vector<2x128xf32>
    %27 = vector.multi_reduction <add>, %26, %cst_16 [1] : vector<2x8x128xf32> to vector<2x128xf32>
    %28 = vector.shape_cast %27 : vector<2x128xf32> to vector<2x1x128xf32>
    %29 = tpu.reciprocal %28 {approx = true} : vector<2x1x128xf32> -> vector<2x1x128xf32>
    %30 = vector.broadcast %29 : vector<2x1x128xf32> to vector<2x8x128xf32>
    %31 = arith.mulf %26, %30 : vector<2x8x128xf32>
    %32 = vector.shape_cast %31 : vector<2x8x128xf32> to vector<16x128xf32>
    %33 = arith.truncf %32 : vector<16x128xf32> to vector<16x128xbf16>
    %c0_17 = arith.constant 0 : index
    %c0_18 = arith.constant 0 : index
    %34 = vector.load %arg5[%c0_17, %c0_18] : memref<128x512xbf16, #tpu.memory_space<vmem>>, vector<128x512xbf16>
    %cst_19 = arith.constant dense<0.000000e+00> : vector<16x512xf32>
    %35 = tpu.matmul %33, %34, %cst_19 {dimension_numbers = #tpu.dot_dimension_numbers<[1], [0], [0], [1], [0, 0, 1, 1], [], []>} : vector<16x128xbf16>, vector<128x512xbf16>, vector<16x512xf32> -> vector<16x512xf32>
    %36 = arith.mulf %17, %35 : vector<16x512xf32>
    %37 = vector.shape_cast %36 : vector<16x512xf32> to vector<2x8x512xf32>
    %cst_20 = arith.constant dense<0.000000e+00> : vector<2x512xf32>
    %38 = vector.multi_reduction <add>, %37, %cst_20 [1] : vector<2x8x512xf32> to vector<2x512xf32>
    %39 = vector.extract_strided_slice %38 {offsets = [0, 0], sizes = [2, 256], strides = [1, 1]} : vector<2x512xf32> to vector<2x256xf32>
    %40 = vector.extract_strided_slice %38 {offsets = [0, 256], sizes = [2, 256], strides = [1, 1]} : vector<2x512xf32> to vector<2x256xf32>
    %41 = arith.mulf %39, %39 : vector<2x256xf32>
    %cst_21 = arith.constant dense<0.000000e+00> : vector<2xf32>
    %42 = vector.multi_reduction <add>, %41, %cst_21 [1] : vector<2x256xf32> to vector<2xf32>
    %43 = vector.shape_cast %42 : vector<2xf32> to vector<2x1xf32>
    %cst_22 = arith.constant 1.000000e-24 : f32
    %44 = vector.broadcast %cst_22 : f32 to vector<2x1xf32>
    %45 = arith.maximumf %43, %44 : vector<2x1xf32>
    %46 = math.rsqrt %45 : vector<2x1xf32>
    %47 = vector.broadcast %46 : vector<2x1xf32> to vector<2x256xf32>
    %48 = arith.mulf %39, %47 : vector<2x256xf32>
    %49 = arith.truncf %48 : vector<2x256xf32> to vector<2x256xbf16>
    %c0_23 = arith.constant 0 : index
    %c0_24 = arith.constant 0 : index
    %50 = vector.load %arg6[%c0_23, %c0_24] : memref<256x256xbf16, #tpu.memory_space<vmem>>, vector<256x128xbf16>
    %cst_25 = arith.constant dense<0.000000e+00> : vector<2x128xf32>
    %51 = tpu.matmul %49, %50, %cst_25 {dimension_numbers = #tpu.dot_dimension_numbers<[1], [0], [0], [1], [0, 0, 1, 1], [], []>} : vector<2x256xbf16>, vector<256x128xbf16>, vector<2x128xf32> -> vector<2x128xf32>
    %cst_26 = arith.constant -1.000000e+00 : f32
    %cst_27 = arith.constant 1.000000e+00 : f32
    %52 = vector.broadcast %cst_26 : f32 to vector<2x128xf32>
    %53 = arith.maximumf %52, %51 : vector<2x128xf32>
    %54 = vector.broadcast %cst_27 : f32 to vector<2x128xf32>
    %55 = arith.minimumf %54, %53 : vector<2x128xf32>
    %56 = vector.broadcast %2 : vector<1x256xf32> to vector<2x256xf32>
    %57 = arith.mulf %39, %56 : vector<2x256xf32>
    %58 = arith.addf %57, %40 : vector<2x256xf32>
    %59 = arith.truncf %58 : vector<2x256xf32> to vector<2x256xbf16>
    %c0_28 = arith.constant 0 : index
    %c128 = arith.constant 128 : index
    %60 = vector.load %arg6[%c0_28, %c128] : memref<256x256xbf16, #tpu.memory_space<vmem>>, vector<256x128xbf16>
    %cst_29 = arith.constant dense<0.000000e+00> : vector<2x128xf32>
    %61 = tpu.matmul %59, %60, %cst_29 {dimension_numbers = #tpu.dot_dimension_numbers<[1], [0], [0], [1], [0, 0, 1, 1], [], []>} : vector<2x256xbf16>, vector<256x128xbf16>, vector<2x128xf32> -> vector<2x128xf32>
    %62 = vector.broadcast %3 : vector<1x128xf32> to vector<2x128xf32>
    %63 = arith.addf %61, %62 : vector<2x128xf32>
    %64 = tpu.concatenate %55, %63 in 1 : vector<2x128xf32>, vector<2x128xf32> -> vector<2x256xf32>
    %c0_30 = arith.constant 0 : index
    %c0_31 = arith.constant 0 : index
    %65 = vector.load %arg8[%c0_30, %c0_31] : memref<2x256xf32, #tpu.memory_space<vmem>>, vector<2x256xf32>
    tpu.vector_store %arg8[%c0_30, %c0_31], %64 {strides = array<i32>} : memref<2x256xf32, #tpu.memory_space<vmem>>, vector<2x256xf32>,
    return
  }
  func.func @transform_0(%arg0: i32) -> (i32, i32) {
    %c0_i32 = arith.constant 0 : i32
    %c0_i32_0 = arith.constant 0 : i32
    return %arg0, %c0_i32 : i32, i32
  }
  func.func @transform_1(%arg0: i32) -> (i32, i32) {
    %c0_i32 = arith.constant 0 : i32
    %c0_i32_0 = arith.constant 0 : i32
    %c0_i32_1 = arith.constant 0 : i32
    return %c0_i32, %c0_i32_0 : i32, i32
  }
  func.func @transform_2(%arg0: i32) -> (i32, i32) {
    %c0_i32 = arith.constant 0 : i32
    %c0_i32_0 = arith.constant 0 : i32
    %c0_i32_1 = arith.constant 0 : i32
    return %c0_i32, %c0_i32_0 : i32, i32
  }
  func.func @transform_3(%arg0: i32) -> (i32, i32) {
    %c0_i32 = arith.constant 0 : i32
    %c0_i32_0 = arith.constant 0 : i32
    %c0_i32_1 = arith.constant 0 : i32
    return %c0_i32, %c0_i32_0 : i32, i32
  }
  func.func @transform_4(%arg0: i32) -> (i32, i32) {
    %c0_i32 = arith.constant 0 : i32
    %c0_i32_0 = arith.constant 0 : i32
    %c0_i32_1 = arith.constant 0 : i32
    return %c0_i32, %c0_i32_0 : i32, i32
  }
  func.func @transform_5(%arg0: i32) -> (i32, i32) {
    %c0_i32 = arith.constant 0 : i32
    %c0_i32_0 = arith.constant 0 : i32
    %c0_i32_1 = arith.constant 0 : i32
    return %c0_i32, %c0_i32_0 : i32, i32
  }
  func.func @transform_6(%arg0: i32) -> (i32, i32) {
    %c0_i32 = arith.constant 0 : i32
    %c0_i32_0 = arith.constant 0 : i32
    %c0_i32_1 = arith.constant 0 : i32
    return %c0_i32, %c0_i32_0 : i32, i32
  }
  func.func @transform_7(%arg0: i32) -> (i32, i32) {
    %c0_i32 = arith.constant 0 : i32
    %c0_i32_0 = arith.constant 0 : i32
    return %arg0, %c0_i32 : i32, i32
  }
}

</mosaic_0001>

<llo_original>
// kernel: emotion_network_forward.1
$region0: #{emotion_network_forward.1}
  #allocation0 [shape = 'u32[]', space=smem, size = 0x4, offset = 0x4, fixed_abs, tag = 'smem constant byte address 0x4 - core index']
  #allocation1 [shape = 'u32[144,128]{1,0:T(1,128)}', space=vmem, size = 0x12000, scoped, tag = 'internal scratch']
  %s0 = inlined_call_operand.vmem [shape: f32[16,128], index: 0, kind: input, shape index: {}]
  %s1 = inlined_call_operand.hbm [shape: bf16[128,256], index: 1, kind: input, shape index: {}]
  %s2 = inlined_call_operand.hbm [shape: bf16[256,256], index: 2, kind: input, shape index: {}]
  %s3 = inlined_call_operand.hbm [shape: bf16[512,128], index: 3, kind: input, shape index: {}]
  %s4 = inlined_call_operand.hbm [shape: bf16[128,512], index: 4, kind: input, shape index: {}]
  %s5 = inlined_call_operand.hbm [shape: bf16[256,256], index: 5, kind: input, shape index: {}]
  %s6 = inlined_call_operand.vmem [shape: f32[8,512], index: 6, kind: input, shape index: {}]
  %s7 = inlined_call_operand.vmem [shape: f32[2,256], index: 7, kind: output, shape index: {}]
  %s8 = sld [smem:[#allocation0]]
  $region58: #{emotion_network_forward.1} parent=0
    _
  %s10 = ssub.s32 1, %s8
  %s11 = scalar_select 0, %s10, %s8
  $region1: #{emotion_network_forward.1} parent=0
    #allocation2 [shape = 'u8[65536]{0}', space=vmem, size = 0x10000, scoped, tag = 'input window, operand 1, single buffered']
    #allocation3 [shape = 's32[1]{0}', space=sflag, size = 0x4, scoped, tag = 'scoped memory for emotion_network_forward.1']
    #allocation4 [shape = 'u8[131072]{0}', space=vmem, size = 0x20000, scoped, tag = 'input window, operand 2, single buffered']
    #allocation5 [shape = 's32[1]{0}', space=sflag, size = 0x4, scoped, tag = 'scoped memory for emotion_network_forward.1']
    #allocation6 [shape = 'u8[131072]{0}', space=vmem, size = 0x20000, scoped, tag = 'input window, operand 3, single buffered']
    #allocation7 [shape = 'u8[131072]{0}', space=vmem, size = 0x20000, scoped, tag = 'input window, operand 4, single buffered']
    #allocation8 [shape = 's32[1]{0}', space=sflag, size = 0x4, scoped, tag = 'scoped memory for emotion_network_forward.1']
    #allocation9 [shape = 'u8[131072]{0}', space=vmem, size = 0x20000, scoped, tag = 'input window, operand 5, single buffered']
    %12 = vsyncpa [#allocation3], 0
    %13 = vsyncpa [#allocation5], 0
    %14 = vsyncpa [#allocation8], 0
    // Predicated region
    $region2: #{emotion_network_forward.1} parent=1 // pred_check
      _
    $region3: #{emotion_network_forward.1} parent=1 // pred_check_branch
      %16 = sbr.rel (0) target = $region5
    $region4: #{emotion_network_forward.1} parent=1 // pred_region
      _
    $region5: #{emotion_network_forward.1} parent=1 // pred_fallthru
      _
    // Predicated region
    $region6: #{emotion_network_forward.1} parent=1 // pred_check
      _
    $region7: #{emotion_network_forward.1} parent=1 // pred_check_branch
      %18 = sbr.rel (0) target = $region9
    $region8: #{emotion_network_forward.1} parent=1 // pred_region
      %s20 = ssub.s32 2048, 2048
      %21 = vsyncadd [#allocation3], %s20
      %s22 = sshll.u32 [#allocation2], 4
      %s23 = int_to_ptr.vmem [resolvable:$true] %s22
      %28 = dma.hbm_to_vmem [thread:$0]  %s1, 2048, %s23, [#allocation3], 128, 128, 8
    $region9: #{emotion_network_forward.1} parent=1 // pred_fallthru
      _
    // Predicated region
    $region10: #{emotion_network_forward.1} parent=1 // pred_check
      _
    $region11: #{emotion_network_forward.1} parent=1 // pred_check_branch
      %30 = sbr.rel (0) target = $region13
    $region12: #{emotion_network_forward.1} parent=1 // pred_region
      %s32 = ssub.s32 4096, 4096
      %33 = vsyncadd [#allocation5], %s32
      %s34 = sshll.u32 [#allocation4], 4
      %s35 = int_to_ptr.vmem [resolvable:$true] %s34
      %40 = dma.hbm_to_vmem [thread:$0]  %s2, 4096, %s35, [#allocation5], 128, 128, 8
    $region13: #{emotion_network_forward.1} parent=1 // pred_fallthru
      _
    // Predicated region
    $region14: #{emotion_network_forward.1} parent=1 // pred_check
      _
    $region15: #{emotion_network_forward.1} parent=1 // pred_check_branch
      %42 = sbr.rel (0) target = $region17
    $region16: #{emotion_network_forward.1} parent=1 // pred_region
      %s44 = ssub.s32 4096, 4096
      %45 = vsyncadd [#allocation5], %s44
      %s46 = sshll.u32 [#allocation6], 4
      %s47 = int_to_ptr.vmem [resolvable:$true] %s46
      %52 = dma.hbm_to_vmem [thread:$0]  %s3, 4096, %s47, [#allocation5], 64, 64, 4
    $region17: #{emotion_network_forward.1} parent=1 // pred_fallthru
      _
    // Predicated region
    $region18: #{emotion_network_forward.1} parent=1 // pred_check
      _
    $region19: #{emotion_network_forward.1} parent=1 // pred_check_branch
      %54 = sbr.rel (0) target = $region21
    $region20: #{emotion_network_forward.1} parent=1 // pred_region
      %s56 = ssub.s32 4096, 4096
      %57 = vsyncadd [#allocation8], %s56
      %s58 = sshll.u32 [#allocation7], 4
      %s59 = int_to_ptr.vmem [resolvable:$true] %s58
      %64 = dma.hbm_to_vmem [thread:$0]  %s4, 4096, %s59, [#allocation8], 256, 256, 16
    $region21: #{emotion_network_forward.1} parent=1 // pred_fallthru
      _
    // Predicated region
    $region22: #{emotion_network_forward.1} parent=1 // pred_check
      _
    $region23: #{emotion_network_forward.1} parent=1 // pred_check_branch
      %66 = sbr.rel (0) target = $region25
    $region24: #{emotion_network_forward.1} parent=1 // pred_region
      %s68 = ssub.s32 4096, 4096
      %69 = vsyncadd [#allocation8], %s68
      %s70 = sshll.u32 [#allocation9], 4
      %s71 = int_to_ptr.vmem [resolvable:$true] %s70
      %76 = dma.hbm_to_vmem [thread:$0]  %s5, 4096, %s71, [#allocation8], 128, 128, 8
    $region25: #{emotion_network_forward.1} parent=1 // pred_fallthru
      _
    // Predicated region
    $region26: #{emotion_network_forward.1} parent=1 // pred_check
      _
    $region27: #{emotion_network_forward.1} parent=1 // pred_check_branch
      %78 = sbr.rel (0) target = $region29
    $region28: #{emotion_network_forward.1} parent=1 // pred_region
      _
    $region29: #{emotion_network_forward.1} parent=1 // pred_fallthru
      _
    // Predicated region
    $region30: #{emotion_network_forward.1} parent=1 // pred_check
      _
    $region31: #{emotion_network_forward.1} parent=1 // pred_check_branch
      %80 = sbr.rel (0) target = $region33
    $region32: #{emotion_network_forward.1} parent=1 // pred_region
      %81 = dma.done [#allocation3], 2048
    $region33: #{emotion_network_forward.1} parent=1 // pred_fallthru
      _
    // Predicated region
    $region34: #{emotion_network_forward.1} parent=1 // pred_check
      _
    $region35: #{emotion_network_forward.1} parent=1 // pred_check_branch
      %83 = sbr.rel (0) target = $region37
    $region36: #{emotion_network_forward.1} parent=1 // pred_region
      %84 = dma.done [#allocation5], 4096
    $region37: #{emotion_network_forward.1} parent=1 // pred_fallthru
      _
    // Predicated region
    $region38: #{emotion_network_forward.1} parent=1 // pred_check
      _
    $region39: #{emotion_network_forward.1} parent=1 // pred_check_branch
      %86 = sbr.rel (0) target = $region41
    $region40: #{emotion_network_forward.1} parent=1 // pred_region
      %87 = dma.done [#allocation5], 4096
    $region41: #{emotion_network_forward.1} parent=1 // pred_fallthru
      _
    // Predicated region
    $region42: #{emotion_network_forward.1} parent=1 // pred_check
      _
    $region43: #{emotion_network_forward.1} parent=1 // pred_check_branch
      %89 = sbr.rel (0) target = $region45
    $region44: #{emotion_network_forward.1} parent=1 // pred_region
      %90 = dma.done [#allocation8], 4096
    $region45: #{emotion_network_forward.1} parent=1 // pred_fallthru
      _
    // Predicated region
    $region46: #{emotion_network_forward.1} parent=1 // pred_check
      _
    $region47: #{emotion_network_forward.1} parent=1 // pred_check_branch
      %92 = sbr.rel (0) target = $region49
    $region48: #{emotion_network_forward.1} parent=1 // pred_region
      %93 = dma.done [#allocation8], 4096
    $region49: #{emotion_network_forward.1} parent=1 // pred_fallthru
      _
    %v95 = vld [vmem:[%s6] ss:$8 sm:$0x3]
    %s96 = scalar_lea.vmem %s6, 1
    %v97 = vld [vmem:[%s96] ss:$8 sm:$0x3]
    %s98 = scalar_lea.vmem %s6, 2
    %v99 = vld [vmem:[%s98] ss:$8 sm:$0x3]
    %v100 = vld [vmem:[%s6 + $0x3] ss:$0 sm:$0xff]
    %v101 = vld [vmem:[%s0] sm:$0xff]
    %v102 = vld [vmem:[%s0 + $0x8] sm:$0xff]
    %v103 = vpack.c.bf16 %v102, %v101
    %v104 = vld [vmem:[#allocation2] sm:$0xff]
    %v105 = vld [vmem:[#allocation2 + $0x8] sm:$0xff]
    %v106 = vld [vmem:[#allocation2 + $0x10] sm:$0xff]
    %v107 = vld [vmem:[#allocation2 + $0x18] sm:$0xff]
    %v108 = vld [vmem:[#allocation2 + $0x20] sm:$0xff]
    %v109 = vld [vmem:[#allocation2 + $0x28] sm:$0xff]
    %v110 = vld [vmem:[#allocation2 + $0x30] sm:$0xff]
    %v111 = vld [vmem:[#allocation2 + $0x38] sm:$0xff]
    %v112 = vld [vmem:[#allocation2 + $0x40] sm:$0xff]
    %v113 = vld [vmem:[#allocation2 + $0x48] sm:$0xff]
    %v114 = vld [vmem:[#allocation2 + $0x50] sm:$0xff]
    %v115 = vld [vmem:[#allocation2 + $0x58] sm:$0xff]
    %v116 = vld [vmem:[#allocation2 + $0x60] sm:$0xff]
    %v117 = vld [vmem:[#allocation2 + $0x68] sm:$0xff]
    %v118 = vld [vmem:[#allocation2 + $0x70] sm:$0xff]
    %v119 = vld [vmem:[#allocation2 + $0x78] sm:$0xff]
    %v121 = vlaneseq
    %v122 = vshrl.u32 %v121, 7
    %v123 = vsub.s32 0, %v122
    %v124 = vrot.slane %v95, %v123
    %v125 = vlaneseq
    %v126 = vshrl.u32 %v125, 7
    %v127 = vsub.s32 1, %v126
    %v128 = vrot.slane %v95, %v127
    %v147 = vunpack.c.l.b16 %v104
    %v148 = vunpack.c.h.b16 %v104
    %v149 = vunpack.c.l.b16 %v105
    %v150 = vunpack.c.h.b16 %v105
    %v151 = vunpack.c.l.b16 %v106
    %v152 = vunpack.c.h.b16 %v106
    %v153 = vunpack.c.l.b16 %v107
    %v154 = vunpack.c.h.b16 %v107
    %v155 = vunpack.c.l.b16 %v108
    %v156 = vunpack.c.h.b16 %v108
    %v157 = vunpack.c.l.b16 %v109
    %v158 = vunpack.c.h.b16 %v109
    %v159 = vunpack.c.l.b16 %v110
    %v160 = vunpack.c.h.b16 %v110
    %v161 = vunpack.c.l.b16 %v111
    %v162 = vunpack.c.h.b16 %v111
    %v163 = vunpack.c.l.b16 %v112
    %v164 = vunpack.c.h.b16 %v112
    %v165 = vunpack.c.l.b16 %v113
    %v166 = vunpack.c.h.b16 %v113
    %v167 = vunpack.c.l.b16 %v114
    %v168 = vunpack.c.h.b16 %v114
    %v169 = vunpack.c.l.b16 %v115
    %v170 = vunpack.c.h.b16 %v115
    %v171 = vunpack.c.l.b16 %v116
    %v172 = vunpack.c.h.b16 %v116
    %v173 = vunpack.c.l.b16 %v117
    %v174 = vunpack.c.h.b16 %v117
    %v175 = vunpack.c.l.b16 %v118
    %v176 = vunpack.c.h.b16 %v118
    %v177 = vunpack.c.l.b16 %v119
    %v178 = vunpack.c.h.b16 %v119
    %v179 = vpack.c.b16 %v149, %v147
    %v180 = vpack.c.b16 %v150, %v148
    %v181 = vpack.c.b16 %v153, %v151
    %v182 = vpack.c.b16 %v154, %v152
    %v183 = vpack.c.b16 %v157, %v155
    %v184 = vpack.c.b16 %v158, %v156
    %v185 = vpack.c.b16 %v161, %v159
    %v186 = vpack.c.b16 %v162, %v160
    %v187 = vpack.c.b16 %v165, %v163
    %v188 = vpack.c.b16 %v166, %v164
    %v189 = vpack.c.b16 %v169, %v167
    %v190 = vpack.c.b16 %v170, %v168
    %v191 = vpack.c.b16 %v173, %v171
    %v192 = vpack.c.b16 %v174, %v172
    %v193 = vpack.c.b16 %v177, %v175
    %v194 = vpack.c.b16 %v178, %v176
    %211 = vmatprep.subr.bf16.mxu0 %v180
    %212 = vmatpush1.bf16.msra.mxu0 %v179
    %213 = vmatprep.subr.bf16.mxu0 %v182
    %214 = vmatpush1.bf16.msra.mxu0 %v181
    %215 = vmatprep.subr.bf16.mxu0 %v184
    %216 = vmatpush1.bf16.msra.mxu0 %v183
    %217 = vmatprep.subr.bf16.mxu0 %v186
    %218 = vmatpush1.bf16.msra.mxu0 %v185
    %219 = vmatprep.subr.bf16.mxu0 %v188
    %220 = vmatpush1.bf16.msra.mxu0 %v187
    %221 = vmatprep.subr.bf16.mxu0 %v190
    %222 = vmatpush1.bf16.msra.mxu0 %v189
    %223 = vmatprep.subr.bf16.mxu0 %v192
    %224 = vmatpush1.bf16.msra.mxu0 %v191
    %225 = vmatprep.subr.bf16.mxu0 %v194
    %226 = vmatpush1.bf16.msra.mxu0 %v193
    %227 = vmatprep.subr.bf16.mxu0 0
    %228 = vmatpush1.bf16.msra.mxu0 0
    %229 = vmatprep.subr.bf16.mxu0 0
    %230 = vmatpush1.bf16.msra.mxu0 0
    %231 = vmatprep.subr.bf16.mxu0 0
    %232 = vmatpush1.bf16.msra.mxu0 0
    %233 = vmatprep.subr.bf16.mxu0 0
    %234 = vmatpush1.bf16.msra.mxu0 0
    %235 = vmatprep.subr.bf16.mxu0 0
    %236 = vmatpush1.bf16.msra.mxu0 0
    %237 = vmatprep.subr.bf16.mxu0 0
    %238 = vmatpush1.bf16.msra.mxu0 0
    %239 = vmatprep.subr.bf16.mxu0 0
    %240 = vmatpush1.bf16.msra.mxu0 0
    %241 = vmatprep.subr.bf16.mxu0 0
    %242 = vmatpush1.bf16.msra.mxu0 0
    %243 = vmatprep.mubr.bf16.mxu0 0
    %244 = vmatmul.mubr.bf16.gmra.mrb[0].mxu0 %v103
    %v245 = vpop.f32.mrb[0].mxu0
    %v246 = vadd.f32 %v124, %v245
    %v247 = vpop.f32.mrb[0].mxu0
    %v248 = vadd.f32 %v128, %v247
    %v249 = vpop.f32.mrb[0].mxu0
    %v250 = vadd.f32 %v124, %v249
    %v251 = vpop.f32.mrb[0].mxu0
    %v252 = vadd.f32 %v128, %v251
    %253 = vdwg.mxu0
    %v254 = vmax.f32 %v246, 0.0
    %v255 = vmax.f32 %v248, 0.0
    %v256 = vmax.f32 %v250, 0.0
    %v257 = vmax.f32 %v252, 0.0
    %v258 = vpack.c.bf16 %v256, %v254
    %v259 = vpack.c.bf16 %v257, %v255
    %v260 = vld [vmem:[#allocation4] sm:$0xff]
    %v261 = vld [vmem:[#allocation4 + $0x8] sm:$0xff]
    %v262 = vld [vmem:[#allocation4 + $0x10] sm:$0xff]
    %v263 = vld [vmem:[#allocation4 + $0x18] sm:$0xff]
    %v264 = vld [vmem:[#allocation4 + $0x20] sm:$0xff]
    %v265 = vld [vmem:[#allocation4 + $0x28] sm:$0xff]
    %v266 = vld [vmem:[#allocation4 + $0x30] sm:$0xff]
    %v267 = vld [vmem:[#allocation4 + $0x38] sm:$0xff]
    %v268 = vld [vmem:[#allocation4 + $0x40] sm:$0xff]
    %v269 = vld [vmem:[#allocation4 + $0x48] sm:$0xff]
    %v270 = vld [vmem:[#allocation4 + $0x50] sm:$0xff]
    %v271 = vld [vmem:[#allocation4 + $0x58] sm:$0xff]
    %v272 = vld [vmem:[#allocation4 + $0x60] sm:$0xff]
    %v273 = vld [vmem:[#allocation4 + $0x68] sm:$0xff]
    %v274 = vld [vmem:[#allocation4 + $0x70] sm:$0xff]
    %v275 = vld [vmem:[#allocation4 + $0x78] sm:$0xff]
    %v276 = vld [vmem:[#allocation4 + $0x80] sm:$0xff]
    %v277 = vld [vmem:[#allocation4 + $0x88] sm:$0xff]
    %v278 = vld [vmem:[#allocation4 + $0x90] sm:$0xff]
    %v279 = vld [vmem:[#allocation4 + $0x98] sm:$0xff]
    %v280 = vld [vmem:[#allocation4 + $0xa0] sm:$0xff]
    %v281 = vld [vmem:[#allocation4 + $0xa8] sm:$0xff]
    %v282 = vld [vmem:[#allocation4 + $0xb0] sm:$0xff]
    %v283 = vld [vmem:[#allocation4 + $0xb8] sm:$0xff]
    %v284 = vld [vmem:[#allocation4 + $0xc0] sm:$0xff]
    %v285 = vld [vmem:[#allocation4 + $0xc8] sm:$0xff]
    %v286 = vld [vmem:[#allocation4 + $0xd0] sm:$0xff]
    %v287 = vld [vmem:[#allocation4 + $0xd8] sm:$0xff]
    %v288 = vld [vmem:[#allocation4 + $0xe0] sm:$0xff]
    %v289 = vld [vmem:[#allocation4 + $0xe8] sm:$0xff]
    %v290 = vld [vmem:[#allocation4 + $0xf0] sm:$0xff]
    %v291 = vld [vmem:[#allocation4 + $0xf8] sm:$0xff]
    %v293 = vlaneseq
    %v294 = vshrl.u32 %v293, 7
    %v295 = vsub.s32 0, %v294
    %v296 = vrot.slane %v97, %v295
    %v297 = vlaneseq
    %v298 = vshrl.u32 %v297, 7
    %v299 = vsub.s32 1, %v298
    %v300 = vrot.slane %v97, %v299
    %v335 = vunpack.c.l.b16 %v260
    %v336 = vunpack.c.h.b16 %v260
    %v337 = vunpack.c.l.b16 %v261
    %v338 = vunpack.c.h.b16 %v261
    %v339 = vunpack.c.l.b16 %v262
    %v340 = vunpack.c.h.b16 %v262
    %v341 = vunpack.c.l.b16 %v263
    %v342 = vunpack.c.h.b16 %v263
    %v343 = vunpack.c.l.b16 %v264
    %v344 = vunpack.c.h.b16 %v264
    %v345 = vunpack.c.l.b16 %v265
    %v346 = vunpack.c.h.b16 %v265
    %v347 = vunpack.c.l.b16 %v266
    %v348 = vunpack.c.h.b16 %v266
    %v349 = vunpack.c.l.b16 %v267
    %v350 = vunpack.c.h.b16 %v267
    %v351 = vunpack.c.l.b16 %v268
    %v352 = vunpack.c.h.b16 %v268
    %v353 = vunpack.c.l.b16 %v269
    %v354 = vunpack.c.h.b16 %v269
    %v355 = vunpack.c.l.b16 %v270
    %v356 = vunpack.c.h.b16 %v270
    %v357 = vunpack.c.l.b16 %v271
    %v358 = vunpack.c.h.b16 %v271
    %v359 = vunpack.c.l.b16 %v272
    %v360 = vunpack.c.h.b16 %v272
    %v361 = vunpack.c.l.b16 %v273
    %v362 = vunpack.c.h.b16 %v273
    %v363 = vunpack.c.l.b16 %v274
    %v364 = vunpack.c.h.b16 %v274
    %v365 = vunpack.c.l.b16 %v275
    %v366 = vunpack.c.h.b16 %v275
    %v367 = vunpack.c.l.b16 %v276
    %v368 = vunpack.c.h.b16 %v276
    %v369 = vunpack.c.l.b16 %v277
    %v370 = vunpack.c.h.b16 %v277
    %v371 = vunpack.c.l.b16 %v278
    %v372 = vunpack.c.h.b16 %v278
    %v373 = vunpack.c.l.b16 %v279
    %v374 = vunpack.c.h.b16 %v279
    %v375 = vunpack.c.l.b16 %v280
    %v376 = vunpack.c.h.b16 %v280
    %v377 = vunpack.c.l.b16 %v281
    %v378 = vunpack.c.h.b16 %v281
    %v379 = vunpack.c.l.b16 %v282
    %v380 = vunpack.c.h.b16 %v282
    %v381 = vunpack.c.l.b16 %v283
    %v382 = vunpack.c.h.b16 %v283
    %v383 = vunpack.c.l.b16 %v284
    %v384 = vunpack.c.h.b16 %v284
    %v385 = vunpack.c.l.b16 %v285
    %v386 = vunpack.c.h.b16 %v285
    %v387 = vunpack.c.l.b16 %v286
    %v388 = vunpack.c.h.b16 %v286
    %v389 = vunpack.c.l.b16 %v287
    %v390 = vunpack.c.h.b16 %v287
    %v391 = vunpack.c.l.b16 %v288
    %v392 = vunpack.c.h.b16 %v288
    %v393 = vunpack.c.l.b16 %v289
    %v394 = vunpack.c.h.b16 %v289
    %v395 = vunpack.c.l.b16 %v290
    %v396 = vunpack.c.h.b16 %v290
    %v397 = vunpack.c.l.b16 %v291
    %v398 = vunpack.c.h.b16 %v291
    %v399 = vpack.c.b16 %v337, %v335
    %v400 = vpack.c.b16 %v338, %v336
    %v401 = vpack.c.b16 %v341, %v339
    %v402 = vpack.c.b16 %v342, %v340
    %v403 = vpack.c.b16 %v345, %v343
    %v404 = vpack.c.b16 %v346, %v344
    %v405 = vpack.c.b16 %v349, %v347
    %v406 = vpack.c.b16 %v350, %v348
    %v407 = vpack.c.b16 %v353, %v351
    %v408 = vpack.c.b16 %v354, %v352
    %v409 = vpack.c.b16 %v357, %v355
    %v410 = vpack.c.b16 %v358, %v356
    %v411 = vpack.c.b16 %v361, %v359
    %v412 = vpack.c.b16 %v362, %v360
    %v413 = vpack.c.b16 %v365, %v363
    %v414 = vpack.c.b16 %v366, %v364
    %v415 = vpack.c.b16 %v369, %v367
    %v416 = vpack.c.b16 %v370, %v368
    %v417 = vpack.c.b16 %v373, %v371
    %v418 = vpack.c.b16 %v374, %v372
    %v419 = vpack.c.b16 %v377, %v375
    %v420 = vpack.c.b16 %v378, %v376
    %v421 = vpack.c.b16 %v381, %v379
    %v422 = vpack.c.b16 %v382, %v380
    %v423 = vpack.c.b16 %v385, %v383
    %v424 = vpack.c.b16 %v386, %v384
    %v425 = vpack.c.b16 %v389, %v387
    %v426 = vpack.c.b16 %v390, %v388
    %v427 = vpack.c.b16 %v393, %v391
    %v428 = vpack.c.b16 %v394, %v392
    %v429 = vpack.c.b16 %v397, %v395
    %v430 = vpack.c.b16 %v398, %v396
    %463 = vmatprep.subr.bf16.mxu0 %v400
    %464 = vmatpush1.bf16.msra.mxu0 %v399
    %465 = vmatprep.subr.bf16.mxu0 %v402
    %466 = vmatpush1.bf16.msra.mxu0 %v401
    %467 = vmatprep.subr.bf16.mxu0 %v404
    %468 = vmatpush1.bf16.msra.mxu0 %v403
    %469 = vmatprep.subr.bf16.mxu0 %v406
    %470 = vmatpush1.bf16.msra.mxu0 %v405
    %471 = vmatprep.subr.bf16.mxu0 %v408
    %472 = vmatpush1.bf16.msra.mxu0 %v407
    %473 = vmatprep.subr.bf16.mxu0 %v410
    %474 = vmatpush1.bf16.msra.mxu0 %v409
    %475 = vmatprep.subr.bf16.mxu0 %v412
    %476 = vmatpush1.bf16.msra.mxu0 %v411
    %477 = vmatprep.subr.bf16.mxu0 %v414
    %478 = vmatpush1.bf16.msra.mxu0 %v413
    %479 = vmatprep.subr.bf16.mxu0 %v416
    %480 = vmatpush1.bf16.msra.mxu0 %v415
    %481 = vmatprep.subr.bf16.mxu0 %v418
    %482 = vmatpush1.bf16.msra.mxu0 %v417
    %483 = vmatprep.subr.bf16.mxu0 %v420
    %484 = vmatpush1.bf16.msra.mxu0 %v419
    %485 = vmatprep.subr.bf16.mxu0 %v422
    %486 = vmatpush1.bf16.msra.mxu0 %v421
    %487 = vmatprep.subr.bf16.mxu0 %v424
    %488 = vmatpush1.bf16.msra.mxu0 %v423
    %489 = vmatprep.subr.bf16.mxu0 %v426
    %490 = vmatpush1.bf16.msra.mxu0 %v425
    %491 = vmatprep.subr.bf16.mxu0 %v428
    %492 = vmatpush1.bf16.msra.mxu0 %v427
    %493 = vmatprep.subr.bf16.mxu0 %v430
    %494 = vmatpush1.bf16.msra.mxu0 %v429
    %495 = vmatprep.mubr.bf16.mxu0 %v259
    %496 = vmatmul.mubr.bf16.gmra.mrb[0].mxu0 %v258
    %v497 = vpop.f32.mrb[0].mxu0
    %v498 = vadd.f32 %v296, %v497
    %v499 = vpop.f32.mrb[0].mxu0
    %v500 = vadd.f32 %v300, %v499
    %v501 = vpop.f32.mrb[0].mxu0
    %v502 = vadd.f32 %v296, %v501
    %v503 = vpop.f32.mrb[0].mxu0
    %v504 = vadd.f32 %v300, %v503
    %505 = vdwg.mxu0
    %v506 = vpack.c.bf16 %v250, %v246
    %v507 = vpack.c.bf16 %v252, %v248
    %v508 = vpack.c.bf16 %v502, %v498
    %v509 = vpack.c.bf16 %v504, %v500
    %v510 = vld [vmem:[#allocation6] sm:$0xf]
    %v511 = vld [vmem:[#allocation6 + $0x4] sm:$0xf]
    %v512 = vld [vmem:[#allocation6 + $0x8] sm:$0xf]
    %v513 = vld [vmem:[#allocation6 + $0xc] sm:$0xf]
    %v514 = vld [vmem:[#allocation6 + $0x10] sm:$0xf]
    %v515 = vld [vmem:[#allocation6 + $0x14] sm:$0xf]
    %v516 = vld [vmem:[#allocation6 + $0x18] sm:$0xf]
    %v517 = vld [vmem:[#allocation6 + $0x1c] sm:$0xf]
    %v518 = vld [vmem:[#allocation6 + $0x20] sm:$0xf]
    %v519 = vld [vmem:[#allocation6 + $0x24] sm:$0xf]
    %v520 = vld [vmem:[#allocation6 + $0x28] sm:$0xf]
    %v521 = vld [vmem:[#allocation6 + $0x2c] sm:$0xf]
    %v522 = vld [vmem:[#allocation6 + $0x30] sm:$0xf]
    %v523 = vld [vmem:[#allocation6 + $0x34] sm:$0xf]
    %v524 = vld [vmem:[#allocation6 + $0x38] sm:$0xf]
    %v525 = vld [vmem:[#allocation6 + $0x3c] sm:$0xf]
    %v526 = vld [vmem:[#allocation6 + $0x40] sm:$0xf]
    %v527 = vld [vmem:[#allocation6 + $0x44] sm:$0xf]
    %v528 = vld [vmem:[#allocation6 + $0x48] sm:$0xf]
    %v529 = vld [vmem:[#allocation6 + $0x4c] sm:$0xf]
    %v530 = vld [vmem:[#allocation6 + $0x50] sm:$0xf]
    %v531 = vld [vmem:[#allocation6 + $0x54] sm:$0xf]
    %v532 = vld [vmem:[#allocation6 + $0x58] sm:$0xf]
    %v533 = vld [vmem:[#allocation6 + $0x5c] sm:$0xf]
    %v534 = vld [vmem:[#allocation6 + $0x60] sm:$0xf]
    %v535 = vld [vmem:[#allocation6 + $0x64] sm:$0xf]
    %v536 = vld [vmem:[#allocation6 + $0x68] sm:$0xf]
    %v537 = vld [vmem:[#allocation6 + $0x6c] sm:$0xf]
    %v538 = vld [vmem:[#allocation6 + $0x70] sm:$0xf]
    %v539 = vld [vmem:[#allocation6 + $0x74] sm:$0xf]
    %v540 = vld [vmem:[#allocation6 + $0x78] sm:$0xf]
    %v541 = vld [vmem:[#allocation6 + $0x7c] sm:$0xf]
    %v542 = vld [vmem:[#allocation6 + $0x80] sm:$0xf]
    %v543 = vld [vmem:[#allocation6 + $0x84] sm:$0xf]
    %v544 = vld [vmem:[#allocation6 + $0x88] sm:$0xf]
    %v545 = vld [vmem:[#allocation6 + $0x8c] sm:$0xf]
    %v546 = vld [vmem:[#allocation6 + $0x90] sm:$0xf]
    %v547 = vld [vmem:[#allocation6 + $0x94] sm:$0xf]
    %v548 = vld [vmem:[#allocation6 + $0x98] sm:$0xf]
    %v549 = vld [vmem:[#allocation6 + $0x9c] sm:$0xf]
    %v550 = vld [vmem:[#allocation6 + $0xa0] sm:$0xf]
    %v551 = vld [vmem:[#allocation6 + $0xa4] sm:$0xf]
    %v552 = vld [vmem:[#allocation6 + $0xa8] sm:$0xf]
    %v553 = vld [vmem:[#allocation6 + $0xac] sm:$0xf]
    %v554 = vld [vmem:[#allocation6 + $0xb0] sm:$0xf]
    %v555 = vld [vmem:[#allocation6 + $0xb4] sm:$0xf]
    %v556 = vld [vmem:[#allocation6 + $0xb8] sm:$0xf]
    %v557 = vld [vmem:[#allocation6 + $0xbc] sm:$0xf]
    %v558 = vld [vmem:[#allocation6 + $0xc0] sm:$0xf]
    %v559 = vld [vmem:[#allocation6 + $0xc4] sm:$0xf]
    %v560 = vld [vmem:[#allocation6 + $0xc8] sm:$0xf]
    %v561 = vld [vmem:[#allocation6 + $0xcc] sm:$0xf]
    %v562 = vld [vmem:[#allocation6 + $0xd0] sm:$0xf]
    %v563 = vld [vmem:[#allocation6 + $0xd4] sm:$0xf]
    %v564 = vld [vmem:[#allocation6 + $0xd8] sm:$0xf]
    %v565 = vld [vmem:[#allocation6 + $0xdc] sm:$0xf]
    %v566 = vld [vmem:[#allocation6 + $0xe0] sm:$0xf]
    %v567 = vld [vmem:[#allocation6 + $0xe4] sm:$0xf]
    %v568 = vld [vmem:[#allocation6 + $0xe8] sm:$0xf]
    %v569 = vld [vmem:[#allocation6 + $0xec] sm:$0xf]
    %v570 = vld [vmem:[#allocation6 + $0xf0] sm:$0xf]
    %v571 = vld [vmem:[#allocation6 + $0xf4] sm:$0xf]
    %v572 = vld [vmem:[#allocation6 + $0xf8] sm:$0xf]
    %v573 = vld [vmem:[#allocation6 + $0xfc] sm:$0xf]
    %v638 = vunpack.c.l.b16 %v510
    %v639 = vunpack.c.l.b16 %v511
    %v640 = vunpack.c.l.b16 %v512
    %v641 = vunpack.c.l.b16 %v513
    %v642 = vunpack.c.l.b16 %v514
    %v643 = vunpack.c.l.b16 %v515
    %v644 = vunpack.c.l.b16 %v516
    %v645 = vunpack.c.l.b16 %v517
    %v646 = vunpack.c.l.b16 %v518
    %v647 = vunpack.c.l.b16 %v519
    %v648 = vunpack.c.l.b16 %v520
    %v649 = vunpack.c.l.b16 %v521
    %v650 = vunpack.c.l.b16 %v522
    %v651 = vunpack.c.l.b16 %v523
    %v652 = vunpack.c.l.b16 %v524
    %v653 = vunpack.c.l.b16 %v525
    %v654 = vunpack.c.l.b16 %v526
    %v655 = vunpack.c.l.b16 %v527
    %v656 = vunpack.c.l.b16 %v528
    %v657 = vunpack.c.l.b16 %v529
    %v658 = vunpack.c.l.b16 %v530
    %v659 = vunpack.c.l.b16 %v531
    %v660 = vunpack.c.l.b16 %v532
    %v661 = vunpack.c.l.b16 %v533
    %v662 = vunpack.c.l.b16 %v534
    %v663 = vunpack.c.l.b16 %v535
    %v664 = vunpack.c.l.b16 %v536
    %v665 = vunpack.c.l.b16 %v537
    %v666 = vunpack.c.l.b16 %v538
    %v667 = vunpack.c.l.b16 %v539
    %v668 = vunpack.c.l.b16 %v540
    %v669 = vunpack.c.l.b16 %v541
    %v670 = vunpack.c.l.b16 %v542
    %v671 = vunpack.c.l.b16 %v543
    %v672 = vunpack.c.l.b16 %v544
    %v673 = vunpack.c.l.b16 %v545
    %v674 = vunpack.c.l.b16 %v546
    %v675 = vunpack.c.l.b16 %v547
    %v676 = vunpack.c.l.b16 %v548
    %v677 = vunpack.c.l.b16 %v549
    %v678 = vunpack.c.l.b16 %v550
    %v679 = vunpack.c.l.b16 %v551
    %v680 = vunpack.c.l.b16 %v552
    %v681 = vunpack.c.l.b16 %v553
    %v682 = vunpack.c.l.b16 %v554
    %v683 = vunpack.c.l.b16 %v555
    %v684 = vunpack.c.l.b16 %v556
    %v685 = vunpack.c.l.b16 %v557
    %v686 = vunpack.c.l.b16 %v558
    %v687 = vunpack.c.l.b16 %v559
    %v688 = vunpack.c.l.b16 %v560
    %v689 = vunpack.c.l.b16 %v561
    %v690 = vunpack.c.l.b16 %v562
    %v691 = vunpack.c.l.b16 %v563
    %v692 = vunpack.c.l.b16 %v564
    %v693 = vunpack.c.l.b16 %v565
    %v694 = vunpack.c.l.b16 %v566
    %v695 = vunpack.c.l.b16 %v567
    %v696 = vunpack.c.l.b16 %v568
    %v697 = vunpack.c.l.b16 %v569
    %v698 = vunpack.c.l.b16 %v570
    %v699 = vunpack.c.l.b16 %v571
    %v700 = vunpack.c.l.b16 %v572
    %v701 = vunpack.c.l.b16 %v573
    %v702 = vpack.c.b16 %v639, %v638
    %v703 = vpack.c.b16 %v641, %v640
    %v704 = vpack.c.b16 %v643, %v642
    %v705 = vpack.c.b16 %v645, %v644
    %v706 = vpack.c.b16 %v647, %v646
    %v707 = vpack.c.b16 %v649, %v648
    %v708 = vpack.c.b16 %v651, %v650
    %v709 = vpack.c.b16 %v653, %v652
    %v710 = vpack.c.b16 %v655, %v654
    %v711 = vpack.c.b16 %v657, %v656
    %v712 = vpack.c.b16 %v659, %v658
    %v713 = vpack.c.b16 %v661, %v660
    %v714 = vpack.c.b16 %v663, %v662
    %v715 = vpack.c.b16 %v665, %v664
    %v716 = vpack.c.b16 %v667, %v666
    %v717 = vpack.c.b16 %v669, %v668
    %v718 = vpack.c.b16 %v671, %v670
    %v719 = vpack.c.b16 %v673, %v672
    %v720 = vpack.c.b16 %v675, %v674
    %v721 = vpack.c.b16 %v677, %v676
    %v722 = vpack.c.b16 %v679, %v678
    %v723 = vpack.c.b16 %v681, %v680
    %v724 = vpack.c.b16 %v683, %v682
    %v725 = vpack.c.b16 %v685, %v684
    %v726 = vpack.c.b16 %v687, %v686
    %v727 = vpack.c.b16 %v689, %v688
    %v728 = vpack.c.b16 %v691, %v690
    %v729 = vpack.c.b16 %v693, %v692
    %v730 = vpack.c.b16 %v695, %v694
    %v731 = vpack.c.b16 %v697, %v696
    %v732 = vpack.c.b16 %v699, %v698
    %v733 = vpack.c.b16 %v701, %v700
    %766 = vmatprep.subr.bf16.mxu0 0
    %767 = vmatpush1.bf16.msra.mxu0 %v702
    %768 = vmatprep.subr.bf16.mxu0 0
    %769 = vmatpush1.bf16.msra.mxu0 %v703
    %770 = vmatprep.subr.bf16.mxu0 0
    %771 = vmatpush1.bf16.msra.mxu0 %v704
    %772 = vmatprep.subr.bf16.mxu0 0
    %773 = vmatpush1.bf16.msra.mxu0 %v705
    %774 = vmatprep.subr.bf16.mxu0 0
    %775 = vmatpush1.bf16.msra.mxu0 %v706
    %776 = vmatprep.subr.bf16.mxu0 0
    %777 = vmatpush1.bf16.msra.mxu0 %v707
    %778 = vmatprep.subr.bf16.mxu0 0
    %779 = vmatpush1.bf16.msra.mxu0 %v708
    %780 = vmatprep.subr.bf16.mxu0 0
    %781 = vmatpush1.bf16.msra.mxu0 %v709
    %782 = vmatprep.subr.bf16.mxu0 0
    %783 = vmatpush1.bf16.msra.mxu0 %v710
    %784 = vmatprep.subr.bf16.mxu0 0
    %785 = vmatpush1.bf16.msra.mxu0 %v711
    %786 = vmatprep.subr.bf16.mxu0 0
    %787 = vmatpush1.bf16.msra.mxu0 %v712
    %788 = vmatprep.subr.bf16.mxu0 0
    %789 = vmatpush1.bf16.msra.mxu0 %v713
    %790 = vmatprep.subr.bf16.mxu0 0
    %791 = vmatpush1.bf16.msra.mxu0 %v714
    %792 = vmatprep.subr.bf16.mxu0 0
    %793 = vmatpush1.bf16.msra.mxu0 %v715
    %794 = vmatprep.subr.bf16.mxu0 0
    %795 = vmatpush1.bf16.msra.mxu0 %v716
    %796 = vmatprep.subr.bf16.mxu0 0
    %797 = vmatpush1.bf16.msra.mxu0 %v717
    %798 = vmatprep.mubr.bf16.mxu0 %v507
    %799 = vmatmul.mubr.bf16.gmra.mrb[0].mxu0 %v506
    %v800 = vpop.f32.mrb[0].mxu0
    %v801 = vadd.f32 0.0, %v800
    %v802 = vpop.f32.mrb[0].mxu0
    %v803 = vpop.f32.mrb[0].mxu0
    %v804 = vadd.f32 0.0, %v803
    %v805 = vpop.f32.mrb[0].mxu0
    %806 = vdwg.mxu0
    %807 = vmatprep.subr.bf16.mxu0 0
    %808 = vmatpush1.bf16.msra.mxu0 %v718
    %809 = vmatprep.subr.bf16.mxu0 0
    %810 = vmatpush1.bf16.msra.mxu0 %v719
    %811 = vmatprep.subr.bf16.mxu0 0
    %812 = vmatpush1.bf16.msra.mxu0 %v720
    %813 = vmatprep.subr.bf16.mxu0 0
    %814 = vmatpush1.bf16.msra.mxu0 %v721
    %815 = vmatprep.subr.bf16.mxu0 0
    %816 = vmatpush1.bf16.msra.mxu0 %v722
    %817 = vmatprep.subr.bf16.mxu0 0
    %818 = vmatpush1.bf16.msra.mxu0 %v723
    %819 = vmatprep.subr.bf16.mxu0 0
    %820 = vmatpush1.bf16.msra.mxu0 %v724
    %821 = vmatprep.subr.bf16.mxu0 0
    %822 = vmatpush1.bf16.msra.mxu0 %v725
    %823 = vmatprep.subr.bf16.mxu0 0
    %824 = vmatpush1.bf16.msra.mxu0 %v726
    %825 = vmatprep.subr.bf16.mxu0 0
    %826 = vmatpush1.bf16.msra.mxu0 %v727
    %827 = vmatprep.subr.bf16.mxu0 0
    %828 = vmatpush1.bf16.msra.mxu0 %v728
    %829 = vmatprep.subr.bf16.mxu0 0
    %830 = vmatpush1.bf16.msra.mxu0 %v729
    %831 = vmatprep.subr.bf16.mxu0 0
    %832 = vmatpush1.bf16.msra.mxu0 %v730
    %833 = vmatprep.subr.bf16.mxu0 0
    %834 = vmatpush1.bf16.msra.mxu0 %v731
    %835 = vmatprep.subr.bf16.mxu0 0
    %836 = vmatpush1.bf16.msra.mxu0 %v732
    %837 = vmatprep.subr.bf16.mxu0 0
    %838 = vmatpush1.bf16.msra.mxu0 %v733
    %839 = vmatprep.mubr.bf16.mxu0 %v509
    %840 = vmatmul.mubr.bf16.gmra.mrb[0].mxu0 %v508
    %v841 = vpop.f32.mrb[0].mxu0
    %v842 = vadd.f32 %v801, %v841
    %v843 = vpop.f32.mrb[0].mxu0
    %v844 = vpop.f32.mrb[0].mxu0
    %v845 = vadd.f32 %v804, %v844
    %v846 = vpop.f32.mrb[0].mxu0
    %847 = vdwg.mxu0
    %v848 = vrot.slane %v842, 4
    %v849 = vmax.f32 %v842, %v848
    %v850 = vrot.slane %v849, 2
    %v851 = vmax.f32 %v849, %v850
    %v852 = vrot.slane %v851, 1
    %v853 = vmax.f32 %v851, %v852
    %v854 = vrot.slane %v845, 4
    %v855 = vmax.f32 %v845, %v854
    %v856 = vrot.slane %v855, 2
    %v857 = vmax.f32 %v855, %v856
    %v858 = vrot.slane %v857, 1
    %v859 = vmax.f32 %v857, %v858
    %v860 = vsub.f32 %v842, %v853
    %v861 = vsub.f32 %v845, %v859
    %v862 = vmul.f32 %v860, 1.442695
    %v863 = vpow.pop %v862
    %v864 = vmul.f32 %v861, 1.442695
    %v865 = vpow.pop %v864
    %v866 = vrot.slane %v863, 4
    %v867 = vadd.f32 %v863, %v866
    %v868 = vrot.slane %v867, 2
    %v869 = vadd.f32 %v867, %v868
    %v870 = vrot.slane %v869, 1
    %v871 = vadd.f32 %v869, %v870
    %v872 = vrot.slane %v865, 4
    %v873 = vadd.f32 %v865, %v872
    %v874 = vrot.slane %v873, 2
    %v875 = vadd.f32 %v873, %v874
    %v876 = vrot.slane %v875, 1
    %v877 = vadd.f32 %v875, %v876
    %v878 = vrcp.pop %v871
    %v879 = vrcp.pop %v877
    %v880 = vmul.f32 %v863, %v878
    %v881 = vmul.f32 %v865, %v879
    %v882 = vpack.c.bf16 %v881, %v880
    %v883 = vld [vmem:[#allocation7] sm:$0xff]
    %v884 = vld [vmem:[#allocation7 + $0x8] sm:$0xff]
    %v885 = vld [vmem:[#allocation7 + $0x10] sm:$0xff]
    %v886 = vld [vmem:[#allocation7 + $0x18] sm:$0xff]
    %v887 = vld [vmem:[#allocation7 + $0x20] sm:$0xff]
    %v888 = vld [vmem:[#allocation7 + $0x28] sm:$0xff]
    %v889 = vld [vmem:[#allocation7 + $0x30] sm:$0xff]
    %v890 = vld [vmem:[#allocation7 + $0x38] sm:$0xff]
    %v891 = vld [vmem:[#allocation7 + $0x40] sm:$0xff]
    %v892 = vld [vmem:[#allocation7 + $0x48] sm:$0xff]
    %v893 = vld [vmem:[#allocation7 + $0x50] sm:$0xff]
    %v894 = vld [vmem:[#allocation7 + $0x58] sm:$0xff]
    %v895 = vld [vmem:[#allocation7 + $0x60] sm:$0xff]
    %v896 = vld [vmem:[#allocation7 + $0x68] sm:$0xff]
    %v897 = vld [vmem:[#allocation7 + $0x70] sm:$0xff]
    %v898 = vld [vmem:[#allocation7 + $0x78] sm:$0xff]
    %v899 = vld [vmem:[#allocation7 + $0x80] sm:$0xff]
    %v900 = vld [vmem:[#allocation7 + $0x88] sm:$0xff]
    %v901 = vld [vmem:[#allocation7 + $0x90] sm:$0xff]
    %v902 = vld [vmem:[#allocation7 + $0x98] sm:$0xff]
    %v903 = vld [vmem:[#allocation7 + $0xa0] sm:$0xff]
    %v904 = vld [vmem:[#allocation7 + $0xa8] sm:$0xff]
    %v905 = vld [vmem:[#allocation7 + $0xb0] sm:$0xff]
    %v906 = vld [vmem:[#allocation7 + $0xb8] sm:$0xff]
    %v907 = vld [vmem:[#allocation7 + $0xc0] sm:$0xff]
    %v908 = vld [vmem:[#allocation7 + $0xc8] sm:$0xff]
    %v909 = vld [vmem:[#allocation7 + $0xd0] sm:$0xff]
    %v910 = vld [vmem:[#allocation7 + $0xd8] sm:$0xff]
    %v911 = vld [vmem:[#allocation7 + $0xe0] sm:$0xff]
    %v912 = vld [vmem:[#allocation7 + $0xe8] sm:$0xff]
    %v913 = vld [vmem:[#allocation7 + $0xf0] sm:$0xff]
    %v914 = vld [vmem:[#allocation7 + $0xf8] sm:$0xff]
    %v947 = vunpack.c.l.b16 %v883
    %v948 = vunpack.c.h.b16 %v883
    %v949 = vunpack.c.l.b16 %v884
    %v950 = vunpack.c.h.b16 %v884
    %v951 = vunpack.c.l.b16 %v885
    %v952 = vunpack.c.h.b16 %v885
    %v953 = vunpack.c.l.b16 %v886
    %v954 = vunpack.c.h.b16 %v886
    %v955 = vunpack.c.l.b16 %v887
    %v956 = vunpack.c.h.b16 %v887
    %v957 = vunpack.c.l.b16 %v888
    %v958 = vunpack.c.h.b16 %v888
    %v959 = vunpack.c.l.b16 %v889
    %v960 = vunpack.c.h.b16 %v889
    %v961 = vunpack.c.l.b16 %v890
    %v962 = vunpack.c.h.b16 %v890
    %v963 = vunpack.c.l.b16 %v891
    %v964 = vunpack.c.h.b16 %v891
    %v965 = vunpack.c.l.b16 %v892
    %v966 = vunpack.c.h.b16 %v892
    %v967 = vunpack.c.l.b16 %v893
    %v968 = vunpack.c.h.b16 %v893
    %v969 = vunpack.c.l.b16 %v894
    %v970 = vunpack.c.h.b16 %v894
    %v971 = vunpack.c.l.b16 %v895
    %v972 = vunpack.c.h.b16 %v895
    %v973 = vunpack.c.l.b16 %v896
    %v974 = vunpack.c.h.b16 %v896
    %v975 = vunpack.c.l.b16 %v897
    %v976 = vunpack.c.h.b16 %v897
    %v977 = vunpack.c.l.b16 %v898
    %v978 = vunpack.c.h.b16 %v898
    %v979 = vunpack.c.l.b16 %v899
    %v980 = vunpack.c.h.b16 %v899
    %v981 = vunpack.c.l.b16 %v900
    %v982 = vunpack.c.h.b16 %v900
    %v983 = vunpack.c.l.b16 %v901
    %v984 = vunpack.c.h.b16 %v901
    %v985 = vunpack.c.l.b16 %v902
    %v986 = vunpack.c.h.b16 %v902
    %v987 = vunpack.c.l.b16 %v903
    %v988 = vunpack.c.h.b16 %v903
    %v989 = vunpack.c.l.b16 %v904
    %v990 = vunpack.c.h.b16 %v904
    %v991 = vunpack.c.l.b16 %v905
    %v992 = vunpack.c.h.b16 %v905
    %v993 = vunpack.c.l.b16 %v906
    %v994 = vunpack.c.h.b16 %v906
    %v995 = vunpack.c.l.b16 %v907
    %v996 = vunpack.c.h.b16 %v907
    %v997 = vunpack.c.l.b16 %v908
    %v998 = vunpack.c.h.b16 %v908
    %v999 = vunpack.c.l.b16 %v909
    %v1000 = vunpack.c.h.b16 %v909
    %v1001 = vunpack.c.l.b16 %v910
    %v1002 = vunpack.c.h.b16 %v910
    %v1003 = vunpack.c.l.b16 %v911
    %v1004 = vunpack.c.h.b16 %v911
    %v1005 = vunpack.c.l.b16 %v912
    %v1006 = vunpack.c.h.b16 %v912
    %v1007 = vunpack.c.l.b16 %v913
    %v1008 = vunpack.c.h.b16 %v913
    %v1009 = vunpack.c.l.b16 %v914
    %v1010 = vunpack.c.h.b16 %v914
    %v1011 = vpack.c.b16 %v951, %v947
    %v1012 = vpack.c.b16 %v952, %v948
    %v1013 = vpack.c.b16 %v953, %v949
    %v1014 = vpack.c.b16 %v954, %v950
    %v1015 = vpack.c.b16 %v959, %v955
    %v1016 = vpack.c.b16 %v960, %v956
    %v1017 = vpack.c.b16 %v961, %v957
    %v1018 = vpack.c.b16 %v962, %v958
    %v1019 = vpack.c.b16 %v967, %v963
    %v1020 = vpack.c.b16 %v968, %v964
    %v1021 = vpack.c.b16 %v969, %v965
    %v1022 = vpack.c.b16 %v970, %v966
    %v1023 = vpack.c.b16 %v975, %v971
    %v1024 = vpack.c.b16 %v976, %v972
    %v1025 = vpack.c.b16 %v977, %v973
    %v1026 = vpack.c.b16 %v978, %v974
    %v1027 = vpack.c.b16 %v983, %v979
    %v1028 = vpack.c.b16 %v984, %v980
    %v1029 = vpack.c.b16 %v985, %v981
    %v1030 = vpack.c.b16 %v986, %v982
    %v1031 = vpack.c.b16 %v991, %v987
    %v1032 = vpack.c.b16 %v992, %v988
    %v1033 = vpack.c.b16 %v993, %v989
    %v1034 = vpack.c.b16 %v994, %v990
    %v1035 = vpack.c.b16 %v999, %v995
    %v1036 = vpack.c.b16 %v1000, %v996
    %v1037 = vpack.c.b16 %v1001, %v997
    %v1038 = vpack.c.b16 %v1002, %v998
    %v1039 = vpack.c.b16 %v1007, %v1003
    %v1040 = vpack.c.b16 %v1008, %v1004
    %v1041 = vpack.c.b16 %v1009, %v1005
    %v1042 = vpack.c.b16 %v1010, %v1006
    %1075 = vmatprep.subr.bf16.mxu0 %v1012
    %1076 = vmatpush1.bf16.msra.mxu0 %v1011
    %1077 = vmatprep.subr.bf16.mxu0 %v1016
    %1078 = vmatpush1.bf16.msra.mxu0 %v1015
    %1079 = vmatprep.subr.bf16.mxu0 %v1020
    %1080 = vmatpush1.bf16.msra.mxu0 %v1019
    %1081 = vmatprep.subr.bf16.mxu0 %v1024
    %1082 = vmatpush1.bf16.msra.mxu0 %v1023
    %1083 = vmatprep.subr.bf16.mxu0 %v1028
    %1084 = vmatpush1.bf16.msra.mxu0 %v1027
    %1085 = vmatprep.subr.bf16.mxu0 %v1032
    %1086 = vmatpush1.bf16.msra.mxu0 %v1031
    %1087 = vmatprep.subr.bf16.mxu0 %v1036
    %1088 = vmatpush1.bf16.msra.mxu0 %v1035
    %1089 = vmatprep.subr.bf16.mxu0 %v1040
    %1090 = vmatpush1.bf16.msra.mxu0 %v1039
    %1091 = vmatprep.subr.bf16.mxu0 0
    %1092 = vmatpush1.bf16.msra.mxu0 0
    %1093 = vmatprep.subr.bf16.mxu0 0
    %1094 = vmatpush1.bf16.msra.mxu0 0
    %1095 = vmatprep.subr.bf16.mxu0 0
    %1096 = vmatpush1.bf16.msra.mxu0 0
    %1097 = vmatprep.subr.bf16.mxu0 0
    %1098 = vmatpush1.bf16.msra.mxu0 0
    %1099 = vmatprep.subr.bf16.mxu0 0
    %1100 = vmatpush1.bf16.msra.mxu0 0
    %1101 = vmatprep.subr.bf16.mxu0 0
    %1102 = vmatpush1.bf16.msra.mxu0 0
    %1103 = vmatprep.subr.bf16.mxu0 0
    %1104 = vmatpush1.bf16.msra.mxu0 0
    %1105 = vmatprep.subr.bf16.mxu0 0
    %1106 = vmatpush1.bf16.msra.mxu0 0
    %1107 = vmatprep.mubr.bf16.mxu0 0
    %1108 = vmatmul.mubr.bf16.gmra.mrb[0].mxu0 %v882
    %v1109 = vpop.f32.mrb[0].mxu0
    %v1110 = vadd.f32 0.0, %v1109
    %v1111 = vpop.f32.mrb[0].mxu0
    %v1112 = vadd.f32 0.0, %v1111
    %v1113 = vpop.f32.mrb[0].mxu0
    %v1114 = vadd.f32 0.0, %v1113
    %v1115 = vpop.f32.mrb[0].mxu0
    %v1116 = vadd.f32 0.0, %v1115
    %1117 = vdwg.mxu0
    %1118 = vmatprep.subr.bf16.mxu0 %v1014
    %1119 = vmatpush1.bf16.msra.mxu0 %v1013
    %1120 = vmatprep.subr.bf16.mxu0 %v1018
    %1121 = vmatpush1.bf16.msra.mxu0 %v1017
    %1122 = vmatprep.subr.bf16.mxu0 %v1022
    %1123 = vmatpush1.bf16.msra.mxu0 %v1021
    %1124 = vmatprep.subr.bf16.mxu0 %v1026
    %1125 = vmatpush1.bf16.msra.mxu0 %v1025
    %1126 = vmatprep.subr.bf16.mxu0 %v1030
    %1127 = vmatpush1.bf16.msra.mxu0 %v1029
    %1128 = vmatprep.subr.bf16.mxu0 %v1034
    %1129 = vmatpush1.bf16.msra.mxu0 %v1033
    %1130 = vmatprep.subr.bf16.mxu0 %v1038
    %1131 = vmatpush1.bf16.msra.mxu0 %v1037
    %1132 = vmatprep.subr.bf16.mxu0 %v1042
    %1133 = vmatpush1.bf16.msra.mxu0 %v1041
    %1134 = vmatprep.subr.bf16.mxu0 0
    %1135 = vmatpush1.bf16.msra.mxu0 0
    %1136 = vmatprep.subr.bf16.mxu0 0
    %1137 = vmatpush1.bf16.msra.mxu0 0
    %1138 = vmatprep.subr.bf16.mxu0 0
    %1139 = vmatpush1.bf16.msra.mxu0 0
    %1140 = vmatprep.subr.bf16.mxu0 0
    %1141 = vmatpush1.bf16.msra.mxu0 0
    %1142 = vmatprep.subr.bf16.mxu0 0
    %1143 = vmatpush1.bf16.msra.mxu0 0
    %1144 = vmatprep.subr.bf16.mxu0 0
    %1145 = vmatpush1.bf16.msra.mxu0 0
    %1146 = vmatprep.subr.bf16.mxu0 0
    %1147 = vmatpush1.bf16.msra.mxu0 0
    %1148 = vmatprep.subr.bf16.mxu0 0
    %1149 = vmatpush1.bf16.msra.mxu0 0
    %1150 = vmatprep.mubr.bf16.mxu0 0
    %1151 = vmatmul.mubr.bf16.gmra.mrb[0].mxu0 %v882
    %v1152 = vpop.f32.mrb[0].mxu0
    %v1153 = vadd.f32 0.0, %v1152
    %v1154 = vpop.f32.mrb[0].mxu0
    %v1155 = vadd.f32 0.0, %v1154
    %v1156 = vpop.f32.mrb[0].mxu0
    %v1157 = vadd.f32 0.0, %v1156
    %v1158 = vpop.f32.mrb[0].mxu0
    %v1159 = vadd.f32 0.0, %v1158
    %1160 = vdwg.mxu0
    %v1161 = vmul.f32 %v246, %v1110
    %v1162 = vmul.f32 %v248, %v1112
    %v1163 = vmul.f32 %v498, %v1153
    %v1164 = vmul.f32 %v500, %v1155
    %v1165 = vmul.f32 %v250, %v1114
    %v1166 = vmul.f32 %v252, %v1116
    %v1167 = vmul.f32 %v502, %v1157
    %v1168 = vmul.f32 %v504, %v1159
    %v1169 = vrot.slane %v1161, 4
    %v1170 = vadd.f32 %v1161, %v1169
    %v1171 = vrot.slane %v1170, 2
    %v1172 = vadd.f32 %v1170, %v1171
    %v1173 = vrot.slane %v1172, 1
    %v1174 = vadd.f32 %v1172, %v1173
    %v1175 = vrot.slane %v1162, 4
    %v1176 = vadd.f32 %v1162, %v1175
    %v1177 = vrot.slane %v1176, 2
    %v1178 = vadd.f32 %v1176, %v1177
    %v1179 = vrot.slane %v1178, 1
    %v1180 = vadd.f32 %v1178, %v1179
    %v1181 = vrot.slane %v1163, 4
    %v1182 = vadd.f32 %v1163, %v1181
    %v1183 = vrot.slane %v1182, 2
    %v1184 = vadd.f32 %v1182, %v1183
    %v1185 = vrot.slane %v1184, 1
    %v1186 = vadd.f32 %v1184, %v1185
    %v1187 = vrot.slane %v1164, 4
    %v1188 = vadd.f32 %v1164, %v1187
    %v1189 = vrot.slane %v1188, 2
    %v1190 = vadd.f32 %v1188, %v1189
    %v1191 = vrot.slane %v1190, 1
    %v1192 = vadd.f32 %v1190, %v1191
    %v1193 = vrot.slane %v1165, 4
    %v1194 = vadd.f32 %v1165, %v1193
    %v1195 = vrot.slane %v1194, 2
    %v1196 = vadd.f32 %v1194, %v1195
    %v1197 = vrot.slane %v1196, 1
    %v1198 = vadd.f32 %v1196, %v1197
    %v1199 = vrot.slane %v1166, 4
    %v1200 = vadd.f32 %v1166, %v1199
    %v1201 = vrot.slane %v1200, 2
    %v1202 = vadd.f32 %v1200, %v1201
    %v1203 = vrot.slane %v1202, 1
    %v1204 = vadd.f32 %v1202, %v1203
    %v1205 = vrot.slane %v1167, 4
    %v1206 = vadd.f32 %v1167, %v1205
    %v1207 = vrot.slane %v1206, 2
    %v1208 = vadd.f32 %v1206, %v1207
    %v1209 = vrot.slane %v1208, 1
    %v1210 = vadd.f32 %v1208, %v1209
    %v1211 = vrot.slane %v1168, 4
    %v1212 = vadd.f32 %v1168, %v1211
    %v1213 = vrot.slane %v1212, 2
    %v1214 = vadd.f32 %v1212, %v1213
    %v1215 = vrot.slane %v1214, 1
    %v1216 = vadd.f32 %v1214, %v1215
    %v1217 = vmul.f32 %v1174, %v1174
    %v1218 = vmul.f32 %v1180, %v1180
    %v1219 = vmul.f32 %v1198, %v1198
    %v1220 = vmul.f32 %v1204, %v1204
    %vm1225 = vcmask 1041409
    %v1226 = vsel %vm1225, %v1219, %v1217
    %v1227 = vsel %vm1225, %v1220, %v1218
    %vm1230 = vcmask 1041408
    %v1231 = vsel %vm1230, %v1226, 0.0
    %v1232 = vsel %vm1230, %v1227, 0.0
    %v1233 = vadd.f32 %v1231, %v1232
    %1234 = vadd.xlane.f32.xlu0 %v1233
    %v1235 = vpop.xlane.xlu0 %1234
    %v1236 = vmax.f32 %v1235, 1e-24
    %v1237 = vrsqrt.pop %v1236
    %v1239 = vrot.slane %v1237, 1
    %v1242 = vmul.f32 %v1174, %v1237
    %v1243 = vmul.f32 %v1180, %v1237
    %v1244 = vmul.f32 %v1198, %v1239
    %v1245 = vmul.f32 %v1204, %v1239
    %v1246 = vpack.c.bf16 %v1242, %v1242
    %v1247 = vpack.c.bf16 %v1243, %v1243
    %v1248 = vpack.c.bf16 %v1244, %v1244
    %v1249 = vpack.c.bf16 %v1245, %v1245
    %v1250 = vld [vmem:[#allocation9] sm:$0xf]
    %v1251 = vld [vmem:[#allocation9 + $0x8] sm:$0xf]
    %v1252 = vld [vmem:[#allocation9 + $0x10] sm:$0xf]
    %v1253 = vld [vmem:[#allocation9 + $0x18] sm:$0xf]
    %v1254 = vld [vmem:[#allocation9 + $0x20] sm:$0xf]
    %v1255 = vld [vmem:[#allocation9 + $0x28] sm:$0xf]
    %v1256 = vld [vmem:[#allocation9 + $0x30] sm:$0xf]
    %v1257 = vld [vmem:[#allocation9 + $0x38] sm:$0xf]
    %v1258 = vld [vmem:[#allocation9 + $0x40] sm:$0xf]
    %v1259 = vld [vmem:[#allocation9 + $0x48] sm:$0xf]
    %v1260 = vld [vmem:[#allocation9 + $0x50] sm:$0xf]
    %v1261 = vld [vmem:[#allocation9 + $0x58] sm:$0xf]
    %v1262 = vld [vmem:[#allocation9 + $0x60] sm:$0xf]
    %v1263 = vld [vmem:[#allocation9 + $0x68] sm:$0xf]
    %v1264 = vld [vmem:[#allocation9 + $0x70] sm:$0xf]
    %v1265 = vld [vmem:[#allocation9 + $0x78] sm:$0xf]
    %v1266 = vld [vmem:[#allocation9 + $0x80] sm:$0xf]
    %v1267 = vld [vmem:[#allocation9 + $0x88] sm:$0xf]
    %v1268 = vld [vmem:[#allocation9 + $0x90] sm:$0xf]
    %v1269 = vld [vmem:[#allocation9 + $0x98] sm:$0xf]
    %v1270 = vld [vmem:[#allocation9 + $0xa0] sm:$0xf]
    %v1271 = vld [vmem:[#allocation9 + $0xa8] sm:$0xf]
    %v1272 = vld [vmem:[#allocation9 + $0xb0] sm:$0xf]
    %v1273 = vld [vmem:[#allocation9 + $0xb8] sm:$0xf]
    %v1274 = vld [vmem:[#allocation9 + $0xc0] sm:$0xf]
    %v1275 = vld [vmem:[#allocation9 + $0xc8] sm:$0xf]
    %v1276 = vld [vmem:[#allocation9 + $0xd0] sm:$0xf]
    %v1277 = vld [vmem:[#allocation9 + $0xd8] sm:$0xf]
    %v1278 = vld [vmem:[#allocation9 + $0xe0] sm:$0xf]
    %v1279 = vld [vmem:[#allocation9 + $0xe8] sm:$0xf]
    %v1280 = vld [vmem:[#allocation9 + $0xf0] sm:$0xf]
    %v1281 = vld [vmem:[#allocation9 + $0xf8] sm:$0xf]
    %v1286 = vunpack.c.l.b16 %v1246
    %v1287 = vunpack.c.l.b16 %v1247
    %v1288 = vunpack.c.l.b16 %v1248
    %v1289 = vunpack.c.l.b16 %v1249
    %v1290 = vrot.slane %v1288, 7
    %v1291 = vsel %vm1225, %v1290, %v1286
    %v1292 = vrot.slane %v1289, 7
    %v1293 = vsel %vm1225, %v1292, %v1287
    %v1294 = vpack.c.b16 %v1291, %v1291
    %v1295 = vpack.c.b16 %v1293, %v1293
    %v1330 = vunpack.c.l.b16 %v1250
    %v1331 = vunpack.c.l.b16 %v1251
    %v1332 = vunpack.c.l.b16 %v1252
    %v1333 = vunpack.c.l.b16 %v1253
    %v1334 = vunpack.c.l.b16 %v1254
    %v1335 = vunpack.c.l.b16 %v1255
    %v1336 = vunpack.c.l.b16 %v1256
    %v1337 = vunpack.c.l.b16 %v1257
    %v1338 = vunpack.c.l.b16 %v1258
    %v1339 = vunpack.c.l.b16 %v1259
    %v1340 = vunpack.c.l.b16 %v1260
    %v1341 = vunpack.c.l.b16 %v1261
    %v1342 = vunpack.c.l.b16 %v1262
    %v1343 = vunpack.c.l.b16 %v1263
    %v1344 = vunpack.c.l.b16 %v1264
    %v1345 = vunpack.c.l.b16 %v1265
    %v1346 = vunpack.c.l.b16 %v1266
    %v1347 = vunpack.c.l.b16 %v1267
    %v1348 = vunpack.c.l.b16 %v1268
    %v1349 = vunpack.c.l.b16 %v1269
    %v1350 = vunpack.c.l.b16 %v1270
    %v1351 = vunpack.c.l.b16 %v1271
    %v1352 = vunpack.c.l.b16 %v1272
    %v1353 = vunpack.c.l.b16 %v1273
    %v1354 = vunpack.c.l.b16 %v1274
    %v1355 = vunpack.c.l.b16 %v1275
    %v1356 = vunpack.c.l.b16 %v1276
    %v1357 = vunpack.c.l.b16 %v1277
    %v1358 = vunpack.c.l.b16 %v1278
    %v1359 = vunpack.c.l.b16 %v1279
    %v1360 = vunpack.c.l.b16 %v1280
    %v1361 = vunpack.c.l.b16 %v1281
    %v1362 = vpack.c.b16 %v1331, %v1330
    %v1363 = vpack.c.b16 %v1333, %v1332
    %v1364 = vpack.c.b16 %v1335, %v1334
    %v1365 = vpack.c.b16 %v1337, %v1336
    %v1366 = vpack.c.b16 %v1339, %v1338
    %v1367 = vpack.c.b16 %v1341, %v1340
    %v1368 = vpack.c.b16 %v1343, %v1342
    %v1369 = vpack.c.b16 %v1345, %v1344
    %v1370 = vpack.c.b16 %v1347, %v1346
    %v1371 = vpack.c.b16 %v1349, %v1348
    %v1372 = vpack.c.b16 %v1351, %v1350
    %v1373 = vpack.c.b16 %v1353, %v1352
    %v1374 = vpack.c.b16 %v1355, %v1354
    %v1375 = vpack.c.b16 %v1357, %v1356
    %v1376 = vpack.c.b16 %v1359, %v1358
    %v1377 = vpack.c.b16 %v1361, %v1360
    %1394 = vmatprep.subr.bf16.mxu0 0
    %1395 = vmatpush1.bf16.msra.mxu0 %v1362
    %1396 = vmatprep.subr.bf16.mxu0 0
    %1397 = vmatpush1.bf16.msra.mxu0 %v1363
    %1398 = vmatprep.subr.bf16.mxu0 0
    %1399 = vmatpush1.bf16.msra.mxu0 %v1364
    %1400 = vmatprep.subr.bf16.mxu0 0
    %1401 = vmatpush1.bf16.msra.mxu0 %v1365
    %1402 = vmatprep.subr.bf16.mxu0 0
    %1403 = vmatpush1.bf16.msra.mxu0 %v1366
    %1404 = vmatprep.subr.bf16.mxu0 0
    %1405 = vmatpush1.bf16.msra.mxu0 %v1367
    %1406 = vmatprep.subr.bf16.mxu0 0
    %1407 = vmatpush1.bf16.msra.mxu0 %v1368
    %1408 = vmatprep.subr.bf16.mxu0 0
    %1409 = vmatpush1.bf16.msra.mxu0 %v1369
    %1410 = vmatprep.subr.bf16.mxu0 0
    %1411 = vmatpush1.bf16.msra.mxu0 %v1370
    %1412 = vmatprep.subr.bf16.mxu0 0
    %1413 = vmatpush1.bf16.msra.mxu0 %v1371
    %1414 = vmatprep.subr.bf16.mxu0 0
    %1415 = vmatpush1.bf16.msra.mxu0 %v1372
    %1416 = vmatprep.subr.bf16.mxu0 0
    %1417 = vmatpush1.bf16.msra.mxu0 %v1373
    %1418 = vmatprep.subr.bf16.mxu0 0
    %1419 = vmatpush1.bf16.msra.mxu0 %v1374
    %1420 = vmatprep.subr.bf16.mxu0 0
    %1421 = vmatpush1.bf16.msra.mxu0 %v1375
    %1422 = vmatprep.subr.bf16.mxu0 0
    %1423 = vmatpush1.bf16.msra.mxu0 %v1376
    %1424 = vmatprep.subr.bf16.mxu0 0
    %1425 = vmatpush1.bf16.msra.mxu0 %v1377
    %1426 = vmatprep.mubr.bf16.mxu0 %v1295
    %1427 = vmatmul.mubr.bf16.gmra.mrb[0].mxu0 %v1294
    %v1428 = vpop.f32.mrb[0].mxu0
    %v1429 = vadd.f32 0.0, %v1428
    %v1430 = vpop.f32.mrb[0].mxu0
    %v1431 = vpop.f32.mrb[0].mxu0
    %v1432 = vpop.f32.mrb[0].mxu0
    %1433 = vdwg.mxu0
    %v1434 = vmax.f32 %v1429, -1.0
    %v1435 = vmin.f32 %v1434, 1.0
    %v1437 = vlaneseq
    %v1438 = vshrl.u32 %v1437, 7
    %v1439 = vsub.s32 0, %v1438
    %v1440 = vrot.slane %v99, %v1439
    %v1441 = vlaneseq
    %v1442 = vshrl.u32 %v1441, 7
    %v1443 = vsub.s32 1, %v1442
    %v1444 = vrot.slane %v99, %v1443
    %v1447 = vmul.f32 %v1174, %v1440
    %v1448 = vmul.f32 %v1180, %v1444
    %v1449 = vmul.f32 %v1198, %v1440
    %v1450 = vmul.f32 %v1204, %v1444
    %v1451 = vadd.f32 %v1447, %v1186
    %v1452 = vadd.f32 %v1448, %v1192
    %v1453 = vadd.f32 %v1449, %v1210
    %v1454 = vadd.f32 %v1450, %v1216
    %v1455 = vpack.c.bf16 %v1451, %v1451
    %v1456 = vpack.c.bf16 %v1452, %v1452
    %v1457 = vpack.c.bf16 %v1453, %v1453
    %v1458 = vpack.c.bf16 %v1454, %v1454
    %v1459 = vld [vmem:[#allocation9 + $0x4] sm:$0xf]
    %v1460 = vld [vmem:[#allocation9 + $0xc] sm:$0xf]
    %v1461 = vld [vmem:[#allocation9 + $0x14] sm:$0xf]
    %v1462 = vld [vmem:[#allocation9 + $0x1c] sm:$0xf]
    %v1463 = vld [vmem:[#allocation9 + $0x24] sm:$0xf]
    %v1464 = vld [vmem:[#allocation9 + $0x2c] sm:$0xf]
    %v1465 = vld [vmem:[#allocation9 + $0x34] sm:$0xf]
    %v1466 = vld [vmem:[#allocation9 + $0x3c] sm:$0xf]
    %v1467 = vld [vmem:[#allocation9 + $0x44] sm:$0xf]
    %v1468 = vld [vmem:[#allocation9 + $0x4c] sm:$0xf]
    %v1469 = vld [vmem:[#allocation9 + $0x54] sm:$0xf]
    %v1470 = vld [vmem:[#allocation9 + $0x5c] sm:$0xf]
    %v1471 = vld [vmem:[#allocation9 + $0x64] sm:$0xf]
    %v1472 = vld [vmem:[#allocation9 + $0x6c] sm:$0xf]
    %v1473 = vld [vmem:[#allocation9 + $0x74] sm:$0xf]
    %v1474 = vld [vmem:[#allocation9 + $0x7c] sm:$0xf]
    %v1475 = vld [vmem:[#allocation9 + $0x84] sm:$0xf]
    %v1476 = vld [vmem:[#allocation9 + $0x8c] sm:$0xf]
    %v1477 = vld [vmem:[#allocation9 + $0x94] sm:$0xf]
    %v1478 = vld [vmem:[#allocation9 + $0x9c] sm:$0xf]
    %v1479 = vld [vmem:[#allocation9 + $0xa4] sm:$0xf]
    %v1480 = vld [vmem:[#allocation9 + $0xac] sm:$0xf]
    %v1481 = vld [vmem:[#allocation9 + $0xb4] sm:$0xf]
    %v1482 = vld [vmem:[#allocation9 + $0xbc] sm:$0xf]
    %v1483 = vld [vmem:[#allocation9 + $0xc4] sm:$0xf]
    %v1484 = vld [vmem:[#allocation9 + $0xcc] sm:$0xf]
    %v1485 = vld [vmem:[#allocation9 + $0xd4] sm:$0xf]
    %v1486 = vld [vmem:[#allocation9 + $0xdc] sm:$0xf]
    %v1487 = vld [vmem:[#allocation9 + $0xe4] sm:$0xf]
    %v1488 = vld [vmem:[#allocation9 + $0xec] sm:$0xf]
    %v1489 = vld [vmem:[#allocation9 + $0xf4] sm:$0xf]
    %v1490 = vld [vmem:[#allocation9 + $0xfc] sm:$0xf]
    %v1495 = vunpack.c.l.b16 %v1455
    %v1496 = vunpack.c.l.b16 %v1456
    %v1497 = vunpack.c.l.b16 %v1457
    %v1498 = vunpack.c.l.b16 %v1458
    %v1499 = vrot.slane %v1497, 7
    %v1500 = vsel %vm1225, %v1499, %v1495
    %v1501 = vrot.slane %v1498, 7
    %v1502 = vsel %vm1225, %v1501, %v1496
    %v1503 = vpack.c.b16 %v1500, %v1500
    %v1504 = vpack.c.b16 %v1502, %v1502
    %v1539 = vunpack.c.l.b16 %v1459
    %v1540 = vunpack.c.l.b16 %v1460
    %v1541 = vunpack.c.l.b16 %v1461
    %v1542 = vunpack.c.l.b16 %v1462
    %v1543 = vunpack.c.l.b16 %v1463
    %v1544 = vunpack.c.l.b16 %v1464
    %v1545 = vunpack.c.l.b16 %v1465
    %v1546 = vunpack.c.l.b16 %v1466
    %v1547 = vunpack.c.l.b16 %v1467
    %v1548 = vunpack.c.l.b16 %v1468
    %v1549 = vunpack.c.l.b16 %v1469
    %v1550 = vunpack.c.l.b16 %v1470
    %v1551 = vunpack.c.l.b16 %v1471
    %v1552 = vunpack.c.l.b16 %v1472
    %v1553 = vunpack.c.l.b16 %v1473
    %v1554 = vunpack.c.l.b16 %v1474
    %v1555 = vunpack.c.l.b16 %v1475
    %v1556 = vunpack.c.l.b16 %v1476
    %v1557 = vunpack.c.l.b16 %v1477
    %v1558 = vunpack.c.l.b16 %v1478
    %v1559 = vunpack.c.l.b16 %v1479
    %v1560 = vunpack.c.l.b16 %v1480
    %v1561 = vunpack.c.l.b16 %v1481
    %v1562 = vunpack.c.l.b16 %v1482
    %v1563 = vunpack.c.l.b16 %v1483
    %v1564 = vunpack.c.l.b16 %v1484
    %v1565 = vunpack.c.l.b16 %v1485
    %v1566 = vunpack.c.l.b16 %v1486
    %v1567 = vunpack.c.l.b16 %v1487
    %v1568 = vunpack.c.l.b16 %v1488
    %v1569 = vunpack.c.l.b16 %v1489
    %v1570 = vunpack.c.l.b16 %v1490
    %v1571 = vpack.c.b16 %v1540, %v1539
    %v1572 = vpack.c.b16 %v1542, %v1541
    %v1573 = vpack.c.b16 %v1544, %v1543
    %v1574 = vpack.c.b16 %v1546, %v1545
    %v1575 = vpack.c.b16 %v1548, %v1547
    %v1576 = vpack.c.b16 %v1550, %v1549
    %v1577 = vpack.c.b16 %v1552, %v1551
    %v1578 = vpack.c.b16 %v1554, %v1553
    %v1579 = vpack.c.b16 %v1556, %v1555
    %v1580 = vpack.c.b16 %v1558, %v1557
    %v1581 = vpack.c.b16 %v1560, %v1559
    %v1582 = vpack.c.b16 %v1562, %v1561
    %v1583 = vpack.c.b16 %v1564, %v1563
    %v1584 = vpack.c.b16 %v1566, %v1565
    %v1585 = vpack.c.b16 %v1568, %v1567
    %v1586 = vpack.c.b16 %v1570, %v1569
    %1603 = vmatprep.subr.bf16.mxu0 0
    %1604 = vmatpush1.bf16.msra.mxu0 %v1571
    %1605 = vmatprep.subr.bf16.mxu0 0
    %1606 = vmatpush1.bf16.msra.mxu0 %v1572
    %1607 = vmatprep.subr.bf16.mxu0 0
    %1608 = vmatpush1.bf16.msra.mxu0 %v1573
    %1609 = vmatprep.subr.bf16.mxu0 0
    %1610 = vmatpush1.bf16.msra.mxu0 %v1574
    %1611 = vmatprep.subr.bf16.mxu0 0
    %1612 = vmatpush1.bf16.msra.mxu0 %v1575
    %1613 = vmatprep.subr.bf16.mxu0 0
    %1614 = vmatpush1.bf16.msra.mxu0 %v1576
    %1615 = vmatprep.subr.bf16.mxu0 0
    %1616 = vmatpush1.bf16.msra.mxu0 %v1577
    %1617 = vmatprep.subr.bf16.mxu0 0
    %1618 = vmatpush1.bf16.msra.mxu0 %v1578
    %1619 = vmatprep.subr.bf16.mxu0 0
    %1620 = vmatpush1.bf16.msra.mxu0 %v1579
    %1621 = vmatprep.subr.bf16.mxu0 0
    %1622 = vmatpush1.bf16.msra.mxu0 %v1580
    %1623 = vmatprep.subr.bf16.mxu0 0
    %1624 = vmatpush1.bf16.msra.mxu0 %v1581
    %1625 = vmatprep.subr.bf16.mxu0 0
    %1626 = vmatpush1.bf16.msra.mxu0 %v1582
    %1627 = vmatprep.subr.bf16.mxu0 0
    %1628 = vmatpush1.bf16.msra.mxu0 %v1583
    %1629 = vmatprep.subr.bf16.mxu0 0
    %1630 = vmatpush1.bf16.msra.mxu0 %v1584
    %1631 = vmatprep.subr.bf16.mxu0 0
    %1632 = vmatpush1.bf16.msra.mxu0 %v1585
    %1633 = vmatprep.subr.bf16.mxu0 0
    %1634 = vmatpush1.bf16.msra.mxu0 %v1586
    %1635 = vmatprep.mubr.bf16.mxu0 %v1504
    %1636 = vmatmul.mubr.bf16.gmra.mrb[0].mxu0 %v1503
    %v1637 = vpop.f32.mrb[0].mxu0
    %v1638 = vadd.f32 %v100, %v1637
    %v1639 = vpop.f32.mrb[0].mxu0
    %v1640 = vpop.f32.mrb[0].mxu0
    %v1641 = vpop.f32.mrb[0].mxu0
    %1642 = vdwg.mxu0
    %v1645 = vcombine.low %v1435, %v1638
    %v1647 = vunpack.c.l.s4 1983009808
    %v1648 = vunpack.c.0.s8 %v1647
    %v1649 = vlaneseq
    %v1650 = vshrl.u32 %v1649, 7
    %v1651 = vsub.s32 %v1648, %v1650
    %v1652 = vrot.slane %v1645, %v1651
    %1654 = vst [vmem:[%s7] sm:$0xf] %v1652
    // Predicated region
    $region50: #{emotion_network_forward.1} parent=1 // pred_check
      _
    $region51: #{emotion_network_forward.1} parent=1 // pred_check_branch
      %1656 = sbr.rel (0) target = $region53
    $region52: #{emotion_network_forward.1} parent=1 // pred_region
      _
    $region53: #{emotion_network_forward.1} parent=1 // pred_fallthru
      _
    // Predicated region
    $region54: #{emotion_network_forward.1} parent=1 // pred_check
      _
    $region55: #{emotion_network_forward.1} parent=1 // pred_check_branch
      %1658 = sbr.rel (0) target = $region57
    $region56: #{emotion_network_forward.1} parent=1 // pred_region
      _
    $region57: #{emotion_network_forward.1} parent=1 // pred_fallthru
      _
    %1659 = vsyncpa [#allocation3], 1
    %1660 = vsyncpa [#allocation5], 1
    %1661 = vsyncpa [#allocation8], 1

</llo_original>
